<compile_context>
chip_gen: v7x
topology: tpu7x:2x2x1
jax: 0.10.0
libtpu: 0.0.40
codegen_flags: <defaults>
</compile_context>

<pallas_src>
import jax
import jax.numpy as jnp
from jax.experimental import pallas as pl
from jax.experimental.pallas import tpu as pltpu


# ---------------------------------------------------------------------------
# Kernels
# ---------------------------------------------------------------------------

def _squash(y):
    # (y / sqrt(1 + y^2) + 1) / 2  ==  0.5 * y * rsqrt(1 + y^2) + 0.5
    # rsqrt rides the EUP slot; everything stays f32 until the final store.
    return 0.5 * y * jax.lax.rsqrt(1.0 + y * y) + 0.5


def logpred_kernel_fullk(x_ref, w_ref, b_ref, o_ref):
    """Full-K contraction per (tm, tn) output tile; no reduction grid axis."""
    y = jnp.dot(x_ref[...], w_ref[...], preferred_element_type=jnp.float32)
    y = y + b_ref[...]
    o_ref[...] = _squash(y).astype(o_ref.dtype)


def logpred_kernel_ksplit(x_ref, w_ref, b_ref, o_ref):
    """K-split variant. Output dtype is f32, so we accumulate directly into
    o_ref (VMEM-resident across the K axis — its index_map ignores k); bias +
    squash are applied once in the finalize branch."""
    k = pl.program_id(2)

    @pl.when(k == 0)
    def _():
        o_ref[...] = jnp.zeros_like(o_ref)

    o_ref[...] += jnp.dot(x_ref[...], w_ref[...], preferred_element_type=jnp.float32)

    @pl.when(k == pl.num_programs(2) - 1)
    def _():
        y = o_ref[...] + b_ref[...]
        o_ref[...] = _squash(y)


# ---------------------------------------------------------------------------
# Wrapper
# ---------------------------------------------------------------------------

def _is_multi_core_chip():
    """True on chips with >1 TensorCore per device (v7x)."""
    try:
        kind = jax.devices()[0].device_kind.lower()
        return ("v7" in kind) or ("tpu7" in kind)
    except Exception:
        return False


def logpred_forward(x, w, b, *, tm=256, tn=512, tk=512,
                    use_bf16=True, prefer_fullk=True):
    """Fused Linear + squash-to-(0,1) forward.

    x: (M, K), w: (K, N), b: (N,) or (1, N).  Returns (M, N) float32.
    M/N/K must be divisible by the (clamped) tile sizes — pad at the caller.
    """
    M, K = x.shape
    K2, N = w.shape
    assert K == K2, "x/w contraction dims mismatch"
    if b.ndim == 1:
        b = b.reshape(1, -1)
    assert b.shape == (1, N)

    # bf16 inputs for the matmul: halves HBM traffic and uses the bf16 MXU
    # fast path. Accumulation / bias / epilogue stay f32.
    if use_bf16:
        x = x.astype(jnp.bfloat16)
        w = w.astype(jnp.bfloat16)
    in_bytes = jnp.dtype(x.dtype).itemsize

    # Clamp tiles to the problem size (lane-dense shapes assumed).
    tm, tn, tk = min(tm, M), min(tn, N), min(tk, K)
    assert M % tm == 0 and N % tn == 0 and K % tk == 0, (
        "pad M/N/K to tile multiples at the caller")

    # Full-K path if the double-buffered footprint stays well under the most
    # conservative scoped-VMEM default (v5e: 16 MiB); also fine on v7x (64 MiB).
    fullk_bytes = (2 * (tm * K + K * tn) * in_bytes   # x/w tiles, double-buffered
                   + 2 * tm * tn * 4                  # f32 output tile, double-buffered
                   + 2 * tn * 4)                      # bias tile
    use_fullk = prefer_fullk and fullk_bytes <= 8 * 1024 * 1024
    if use_fullk:
        tk = K

    cost = pl.CostEstimate(
        flops=2 * M * N * K + 4 * M * N,
        transcendentals=M * N,                        # one rsqrt per output element
        bytes_accessed=(M * K + K * N) * in_bytes + N * 4 + M * N * 4,
    )

    def call(dim_sem):
        if use_fullk:
            grid_spec = pltpu.PrefetchScalarGridSpec(
                num_scalar_prefetch=0,
                grid=(M // tm, N // tn),
                in_specs=[
                    pl.BlockSpec((tm, K), lambda i, j: (i, 0)),   # x slab
                    pl.BlockSpec((K, tn), lambda i, j: (0, j)),   # w slab
                    pl.BlockSpec((1, tn), lambda i, j: (0, j)),   # bias
                ],
                out_specs=pl.BlockSpec((tm, tn), lambda i, j: (i, j)),
            )
            kernel = logpred_kernel_fullk
        else:
            grid_spec = pltpu.PrefetchScalarGridSpec(
                num_scalar_prefetch=0,
                grid=(M // tm, N // tn, K // tk),                 # reduction last
                in_specs=[
                    pl.BlockSpec((tm, tk), lambda i, j, k: (i, k)),
                    pl.BlockSpec((tk, tn), lambda i, j, k: (k, j)),
                    pl.BlockSpec((1, tn), lambda i, j, k: (0, j)),
                ],
                out_specs=pl.BlockSpec((tm, tn), lambda i, j, k: (i, j)),
            )
            kernel = logpred_kernel_ksplit
        return pl.pallas_call(
            kernel,
            out_shape=jax.ShapeDtypeStruct((M, N), jnp.float32),
            grid_spec=grid_spec,
            compiler_params=pltpu.CompilerParams(dimension_semantics=dim_sem),
            cost_estimate=cost,
        )(x, w, b)

    # dimension_semantics candidates: CORE_PARALLEL on the M axis engages the
    # second TensorCore on v7x; fall back to plain PARALLEL elsewhere / if the
    # compiler rejects it.
    base = [pltpu.PARALLEL, pltpu.PARALLEL] + ([] if use_fullk else [pltpu.ARBITRARY])
    candidates = []
    if _is_multi_core_chip() and (M // tm) >= 2:
        core = list(base)
        core[0] = pltpu.CORE_PARALLEL
        candidates.append(tuple(core))
    candidates.append(tuple(base))

    last_err = None
    for idx, sem in enumerate(candidates):
        try:
            out = call(sem)
            if idx + 1 < len(candidates):
                jax.block_until_ready(out)   # surface errors before committing
            return out
        except Exception as e:               # e.g. CORE_PARALLEL rejected
            last_err = e
    raise last_err


def reference_forward(x, w, b):
    y = x @ w + b.reshape(1, -1)
    y = y / jnp.sqrt(1.0 + y * y)
    return (y + 1.0) / 2.0


if __name__ == "__main__":
    # Lane-dense, tile-aligned demo shapes (M axis extent 2 at tm=256).
    M, K, N = 512, 512, 512

    key = jax.random.PRNGKey(0)
    kx, kw, kb = jax.random.split(key, 3)

    x = jax.random.normal(kx, (M, K), dtype=jnp.float32)
    # Deterministic synthetic Linear-layer parameters ("net").
    w = jax.random.normal(kw, (K, N), dtype=jnp.float32) * (1.0 / jnp.sqrt(K))
    b = jax.random.normal(kb, (1, N), dtype=jnp.float32) * 0.1

    ref = reference_forward(x, w, b)

    # Full-K fast path (grid = (2, 1), no reduction axis).
    out = logpred_forward(x, w, b)
    out = jax.block_until_ready(out)
    assert out.shape == (M, N) and out.dtype == jnp.float32
    # bf16 input quantization only -> loose-but-tight-enough tolerance vs f32 ref.
    assert jnp.allclose(out, ref, atol=2e-2, rtol=2e-2), "fullk mismatch vs reference"
    assert bool(jnp.all(out >= 0.0)) and bool(jnp.all(out <= 1.0))

    # K-split path (grid = (2, 1, 2)) exercised as well.
    out2 = logpred_forward(x, w, b, tk=256, prefer_fullk=False)
    out2 = jax.block_until_ready(out2)
    assert jnp.allclose(out2, ref, atol=2e-2, rtol=2e-2), "ksplit mismatch vs reference"
    assert bool(jnp.all(out2 >= 0.0)) and bool(jnp.all(out2 <= 1.0))

    print("KERNEL_OK")
</pallas_src>

<mosaic_0001>
module attributes {stable_mosaic.version = 11 : i64} {
  func.func @logpred_kernel_fullk(%arg0: i32, %arg1: i32, %arg2: memref<256x512xbf16, #tpu.memory_space<vmem>>, %arg3: memref<512x512xbf16, #tpu.memory_space<vmem>>, %arg4: memref<1x512xf32, #tpu.memory_space<vmem>>, %arg5: memref<256x512xf32, #tpu.memory_space<vmem>>) attributes {dimension_semantics = [#tpu.dimension_semantics<parallel>, #tpu.dimension_semantics<parallel>], iteration_bounds = array<i64: 2, 1>, scalar_prefetch = 0 : i64, scratch_operands = 0 : i64, tpu.core_type = #tpu.core_type<tc>, window_params = [{transform_indices = @transform_0, window_bounds = array<i64: 256, 512>}, {transform_indices = @transform_1, window_bounds = array<i64: 512, 512>}, {transform_indices = @transform_2, window_bounds = array<i64: 1, 512>}, {transform_indices = @transform_3, window_bounds = array<i64: 256, 512>}]} {
    %c0 = arith.constant 0 : index
    %c0_0 = arith.constant 0 : index
    %0 = vector.load %arg2[%c0, %c0_0] : memref<256x512xbf16, #tpu.memory_space<vmem>>, vector<256x512xbf16>
    %c0_1 = arith.constant 0 : index
    %c0_2 = arith.constant 0 : index
    %1 = vector.load %arg3[%c0_1, %c0_2] : memref<512x512xbf16, #tpu.memory_space<vmem>>, vector<512x512xbf16>
    %cst = arith.constant dense<0.000000e+00> : vector<256x512xf32>
    %2 = tpu.matmul %0, %1, %cst {dimension_numbers = #tpu.dot_dimension_numbers<[1], [0], [0], [1], [0, 0, 1, 1], [], []>} : vector<256x512xbf16>, vector<512x512xbf16>, vector<256x512xf32> -> vector<256x512xf32>
    %c0_3 = arith.constant 0 : index
    %c0_4 = arith.constant 0 : index
    %3 = vector.load %arg4[%c0_3, %c0_4] : memref<1x512xf32, #tpu.memory_space<vmem>>, vector<1x512xf32>
    %4 = vector.broadcast %3 : vector<1x512xf32> to vector<256x512xf32>
    %5 = arith.addf %2, %4 : vector<256x512xf32>
    %cst_5 = arith.constant 5.000000e-01 : f32
    %6 = vector.broadcast %cst_5 : f32 to vector<256x512xf32>
    %7 = arith.mulf %6, %5 : vector<256x512xf32>
    %8 = arith.mulf %5, %5 : vector<256x512xf32>
    %cst_6 = arith.constant 1.000000e+00 : f32
    %9 = vector.broadcast %cst_6 : f32 to vector<256x512xf32>
    %10 = arith.addf %9, %8 : vector<256x512xf32>
    %11 = math.rsqrt %10 : vector<256x512xf32>
    %12 = arith.mulf %7, %11 : vector<256x512xf32>
    %cst_7 = arith.constant 5.000000e-01 : f32
    %13 = vector.broadcast %cst_7 : f32 to vector<256x512xf32>
    %14 = arith.addf %12, %13 : vector<256x512xf32>
    %c0_8 = arith.constant 0 : index
    %c0_9 = arith.constant 0 : index
    %15 = vector.load %arg5[%c0_8, %c0_9] : memref<256x512xf32, #tpu.memory_space<vmem>>, vector<256x512xf32>
    tpu.vector_store %arg5[%c0_8, %c0_9], %14 {strides = array<i32>} : memref<256x512xf32, #tpu.memory_space<vmem>>, vector<256x512xf32>,
    return
  }
  func.func @transform_0(%arg0: i32, %arg1: i32) -> (i32, i32) {
    %c0_i32 = arith.constant 0 : i32
    %c0_i32_0 = arith.constant 0 : i32
    return %arg0, %c0_i32 : i32, i32
  }
  func.func @transform_1(%arg0: i32, %arg1: i32) -> (i32, i32) {
    %c0_i32 = arith.constant 0 : i32
    %c0_i32_0 = arith.constant 0 : i32
    return %c0_i32, %arg1 : i32, i32
  }
  func.func @transform_2(%arg0: i32, %arg1: i32) -> (i32, i32) {
    %c0_i32 = arith.constant 0 : i32
    %c0_i32_0 = arith.constant 0 : i32
    return %c0_i32, %arg1 : i32, i32
  }
  func.func @transform_3(%arg0: i32, %arg1: i32) -> (i32, i32) {
    %c0_i32 = arith.constant 0 : i32
    return %arg0, %arg1 : i32, i32
  }
}

</mosaic_0001>

<llo_original>
// kernel: tpu_custom_call.1
$region0: #{tpu_custom_call.1}
  #allocation0 [shape = 'u32[]', space=smem, size = 0x4, offset = 0x4, fixed_abs, tag = 'smem constant byte address 0x4 - core index']
  #allocation1 [shape = 'u32[144,128]{1,0:T(1,128)}', space=vmem, size = 0x12000, scoped, tag = 'internal scratch']
  %s0 = inlined_call_operand.hbm [shape: bf16[512,512], index: 0, kind: input, shape index: {}]
  %s1 = inlined_call_operand.hbm [shape: bf16[512,512], index: 1, kind: input, shape index: {}]
  %s2 = inlined_call_operand.vmem [shape: f32[1,512], index: 2, kind: input, shape index: {}]
  %s3 = inlined_call_operand.hbm [shape: f32[512,512], index: 3, kind: output, shape index: {}]
  %s4 = sld [smem:[#allocation0]]
  $region53: #{tpu_custom_call.1} parent=0
    _
  %s6 = ssub.s32 1, %s4
  %s7 = scalar_select 0, %s6, %s4
  $region1: #{tpu_custom_call.1} parent=0
    #allocation2 [shape = 'u8[524288]{0}', space=vmem, size = 0x80000, scoped, tag = 'input window, operand 0']
    #allocation3 [shape = 's32[2]{0}', space=sflag, size = 0x8, scoped, tag = 'scoped memory for tpu_custom_call.1']
    #allocation4 [shape = 's32[2]{0}', space=sflag, size = 0x8, scoped, tag = 'scoped memory for tpu_custom_call.1']
    #allocation5 [shape = 'u8[524288]{0}', space=vmem, size = 0x80000, scoped, tag = 'input window, operand 1, single buffered']
    #allocation6 [shape = 's32[1]{0}', space=sflag, size = 0x4, scoped, tag = 'scoped memory for tpu_custom_call.1']
    #allocation7 [shape = 'u8[1048576]{0}', space=vmem, size = 0x100000, scoped, tag = 'output window, operand 0']
    %8 = vsyncpa [#allocation3], 0
    %s9 = scalar_lea.sflag [#allocation3], 1
    %10 = vsyncpa %s9, 0
    %11 = vsyncpa [#allocation6], 0
    %12 = vsyncpa [#allocation4], 0
    %s13 = scalar_lea.sflag [#allocation4], 1
    %14 = vsyncpa %s13, 0
    loop: start=0, step=1, limit=4
    $region2: #{tpu_custom_call.1} parent=1 // loop_pre_header
      _
    $region3: #{tpu_custom_call.1} parent=1 // loop_header
      %s16 = sphi 0, %s20
      %p17 = scmp.ge.s32.totalorder %s16, 4
      %s23 = sphi 0, %s35
      %s24 = sphi 0, %s31
      %s25 = sphi 0, %s23
      %s26 = sphi 0, %s24
      %s27 = sphi 0, %s25
      %s28 = sphi 0, %s26
      %s38 = sphi 0, %s40
      %s41 = sphi 0, %s38
      %s42 = sphi 0, %s41
      %s58 = sphi 0, %s42
      %s64 = sphi 0, %s66
      %s67 = sphi 0, %s64
      %s68 = sphi 0, %s67
      %s84 = sphi 0, %s68
      %s90 = sphi 0, %s92
      %s93 = sphi 0, %s90
      %s94 = sphi 0, %s93
      %s110 = sphi 0, %s94
      %s118 = sphi 0, %s120
      %s121 = sphi 0, %s118
      %s122 = sphi 0, %s121
      %s138 = sphi 0, %s122
    $region4: #{tpu_custom_call.1} parent=1 // loop_header_branch
      %19 = sbr.rel (%p17) target = $region8
    $region5: #{tpu_custom_call.1} parent=1 // loop_body
      %s21 = ssub.s32 %s16, 1
      %s22 = ssub.s32 %s16, 2
      %s29 = sadd.s32 1, %s24
      %p30 = scmp.ge.s32.totalorder %s29, 1
      %s31 = scalar_select %p30, 0, %s29
      %s32 = sadd.s32 1, %s23
      %s33 = scalar_select %p30, %s32, %s23
      %p34 = scmp.ge.s32.totalorder %s33, 2
      %s35 = scalar_select %p34, 0, %s33
      %s36 = ssub.s32 %s23, %s35
      %p37 = scmp.eq.s32.totalorder %s36, 0
      %s39 = sadd.s32 %s38, 1
      %s40 = scalar_select %p37, %s38, %s39
      %p43 = pneg %p37
      %p44 = scmp.eq.s32.totalorder %s16, 1
      %p45 = por %p43, %p44
      %p46 = scmp.ne.s32.totalorder %s38, %s41
      %p47 = scmp.eq.s32.totalorder %s16, 0
      %p48 = por %p46, %p47
      %p49 = scmp.ne.s32.totalorder %s38, %s41
      %p50 = scmp.eq.s32.totalorder %s21, 1
      %p51 = por %p49, %p50
      %p52 = scmp.ne.s32.totalorder %s41, %s42
      %p53 = scmp.eq.s32.totalorder %s21, 0
      %p54 = por %p52, %p53
      %p55 = scmp.ne.s32.totalorder %s41, %s42
      %p56 = scmp.eq.s32.totalorder %s22, 1
      %p57 = por %p55, %p56
      %p59 = scmp.ne.s32.totalorder %s42, %s58
      %p60 = scmp.eq.s32.totalorder %s22, 0
      %p61 = por %p59, %p60
      %s62 = ssub.s32 %s24, %s31
      %p63 = scmp.eq.s32.totalorder %s62, 0
      %s65 = sadd.s32 %s64, 1
      %s66 = scalar_select %p63, %s64, %s65
      %p69 = pneg %p63
      %p70 = scmp.eq.s32.totalorder %s16, 1
      %p71 = por %p69, %p70
      %p72 = scmp.ne.s32.totalorder %s64, %s67
      %p73 = scmp.eq.s32.totalorder %s16, 0
      %p74 = por %p72, %p73
      %p75 = scmp.ne.s32.totalorder %s64, %s67
      %p76 = scmp.eq.s32.totalorder %s21, 1
      %p77 = por %p75, %p76
      %p78 = scmp.ne.s32.totalorder %s67, %s68
      %p79 = scmp.eq.s32.totalorder %s21, 0
      %p80 = por %p78, %p79
      %p81 = scmp.ne.s32.totalorder %s67, %s68
      %p82 = scmp.eq.s32.totalorder %s22, 1
      %p83 = por %p81, %p82
      %p85 = scmp.ne.s32.totalorder %s68, %s84
      %p86 = scmp.eq.s32.totalorder %s22, 0
      %p87 = por %p85, %p86
      %s88 = ssub.s32 %s24, %s31
      %p89 = scmp.eq.s32.totalorder %s88, 0
      %s91 = sadd.s32 %s90, 1
      %s92 = scalar_select %p89, %s90, %s91
      %p95 = pneg %p89
      %p96 = scmp.eq.s32.totalorder %s16, 1
      %p97 = por %p95, %p96
      %p98 = scmp.ne.s32.totalorder %s90, %s93
      %p99 = scmp.eq.s32.totalorder %s16, 0
      %p100 = por %p98, %p99
      %p101 = scmp.ne.s32.totalorder %s90, %s93
      %p102 = scmp.eq.s32.totalorder %s21, 1
      %p103 = por %p101, %p102
      %p104 = scmp.ne.s32.totalorder %s93, %s94
      %p105 = scmp.eq.s32.totalorder %s21, 0
      %p106 = por %p104, %p105
      %p107 = scmp.ne.s32.totalorder %s93, %s94
      %p108 = scmp.eq.s32.totalorder %s22, 1
      %p109 = por %p107, %p108
      %p111 = scmp.ne.s32.totalorder %s94, %s110
      %p112 = scmp.eq.s32.totalorder %s22, 0
      %p113 = por %p111, %p112
      %s114 = ssub.s32 %s23, %s35
      %s115 = ssub.s32 %s24, %s31
      %s116 = sor.u32 %s114, %s115
      %p117 = scmp.eq.s32.totalorder %s116, 0
      %s119 = sadd.s32 %s118, 1
      %s120 = scalar_select %p117, %s118, %s119
      %p123 = pneg %p117
      %p124 = scmp.eq.s32.totalorder %s16, 1
      %p125 = por %p123, %p124
      %p126 = scmp.ne.s32.totalorder %s118, %s121
      %p127 = scmp.eq.s32.totalorder %s16, 0
      %p128 = por %p126, %p127
      %p129 = scmp.ne.s32.totalorder %s118, %s121
      %p130 = scmp.eq.s32.totalorder %s21, 1
      %p131 = por %p129, %p130
      %p132 = scmp.ne.s32.totalorder %s121, %s122
      %p133 = scmp.eq.s32.totalorder %s21, 0
      %p134 = por %p132, %p133
      %p135 = scmp.ne.s32.totalorder %s121, %s122
      %p136 = scmp.eq.s32.totalorder %s22, 1
      %p137 = por %p135, %p136
      %p139 = scmp.ne.s32.totalorder %s122, %s138
      %p140 = scmp.eq.s32.totalorder %s22, 0
      %p141 = por %p139, %p140
      %p142 = scmp.le.s32.totalorder 1, %s16
      %p143 = scmp.lt.s32.totalorder %s16, 3
      %p144 = pnand %p142, %p143
      %p145 = pneg %p144
      // Predicated region
      $region9: #{tpu_custom_call.1} parent=5 // pred_check
        _
      $region10: #{tpu_custom_call.1} parent=5 // pred_check_branch
        %147 = sbr.rel (%p144) target = $region12
      $region11: #{tpu_custom_call.1} parent=5 // pred_region
        %s148 = ssub.s32 %s16, 1
        // Predicated region
        $region13: #{tpu_custom_call.1} parent=11 // pred_check
          %p149 = pneg %p80
        $region14: #{tpu_custom_call.1} parent=11 // pred_check_branch
          %151 = sbr.rel (%p149) target = $region16
        $region15: #{tpu_custom_call.1} parent=11 // pred_region
          %s152 = smul.u32 4, %s26
          %s154 = ssub.s32 16384, 16384
          %155 = vsyncadd [#allocation6], %s154
          %s156 = smul.addr %s152, 64
          %s157 = scalar_lea.hbm %s1, %s156
          %s158 = sshll.u32 [#allocation5], 4
          %s159 = int_to_ptr.vmem [resolvable:$true] %s158
          %164 = dma.hbm_to_vmem [thread:$0]  %s157, 16384, %s159, [#allocation6], 256, 256, 16
        $region16: #{tpu_custom_call.1} parent=11 // pred_fallthru
          _
        // Predicated region
        $region17: #{tpu_custom_call.1} parent=11 // pred_check
          %p165 = pneg %p106
        $region18: #{tpu_custom_call.1} parent=11 // pred_check_branch
          %167 = sbr.rel (%p165) target = $region20
        $region19: #{tpu_custom_call.1} parent=11 // pred_region
          %s168 = smul.u32 4, %s26
          %p169 = scmp.lt.s32.totalorder %s168, 3
          %s170 = scalar_select %p169, %s168, 3
          %s171 = scalar_lea.vmem %s2, %s170
          %s172 = smul.u32 4, %s26
        $region20: #{tpu_custom_call.1} parent=11 // pred_fallthru
          _
      $region12: #{tpu_custom_call.1} parent=5 // pred_fallthru
        _
      %p173 = scmp.lt.s32.totalorder %s16, 2
      // Predicated region
      $region21: #{tpu_custom_call.1} parent=5 // pred_check
        %p174 = pneg %p173
      $region22: #{tpu_custom_call.1} parent=5 // pred_check_branch
        %176 = sbr.rel (%p174) target = $region24
      $region23: #{tpu_custom_call.1} parent=5 // pred_region
        // Predicated region
        $region25: #{tpu_custom_call.1} parent=23 // pred_check
          %p177 = pneg %p48
        $region26: #{tpu_custom_call.1} parent=23 // pred_check_branch
          %179 = sbr.rel (%p177) target = $region28
        $region27: #{tpu_custom_call.1} parent=23 // pred_region
          %s180 = sand.u32 %s38, 1
          %s181 = scalar_lea.sflag [#allocation3], %s180
          %s182 = sand.u32 %s38, 1
          %s183 = smul.addr %s182, 512
          %s184 = scalar_lea.vmem [#allocation2], %s183
          %s185 = smul.u32 32, %s23
          %s187 = ssub.s32 8192, 8192
          %188 = vsyncadd %s181, %s187
          %s189 = smul.addr %s185, 4
          %s190 = smul.addr %s189, 64
          %s191 = scalar_lea.hbm %s0, %s190
          %s192 = sshll.u32 %s184, 4
          %s193 = int_to_ptr.vmem [resolvable:$true] %s192
          %198 = dma.hbm_to_vmem [thread:$0]  %s191, 8192, %s193, %s181, 256, 256, 16
        $region28: #{tpu_custom_call.1} parent=23 // pred_fallthru
          _
      $region24: #{tpu_custom_call.1} parent=5 // pred_fallthru
        _
      %p199 = scmp.le.s32.totalorder 1, %s16
      %p200 = scmp.lt.s32.totalorder %s16, 3
      %p201 = pnand %p199, %p200
      %p202 = pneg %p201
      // Predicated region
      $region29: #{tpu_custom_call.1} parent=5 // pred_check
        _
      $region30: #{tpu_custom_call.1} parent=5 // pred_check_branch
        %204 = sbr.rel (%p201) target = $region32
      $region31: #{tpu_custom_call.1} parent=5 // pred_region
        %s205 = ssub.s32 %s16, 1
        %s206 = sand.u32 %s41, 1
        %s207 = scalar_lea.sflag [#allocation3], %s206
        %s208 = sand.u32 %s41, 1
        %s209 = smul.addr %s208, 512
        %s210 = scalar_lea.vmem [#allocation2], %s209
        // Predicated region
        $region33: #{tpu_custom_call.1} parent=31 // pred_check
          %p211 = pneg %p54
        $region34: #{tpu_custom_call.1} parent=31 // pred_check_branch
          %213 = sbr.rel (%p211) target = $region36
        $region35: #{tpu_custom_call.1} parent=31 // pred_region
          %214 = dma.done %s207, 8192
        $region36: #{tpu_custom_call.1} parent=31 // pred_fallthru
          _
        // Predicated region
        $region37: #{tpu_custom_call.1} parent=31 // pred_check
          %p215 = pneg %p80
        $region38: #{tpu_custom_call.1} parent=31 // pred_check_branch
          %217 = sbr.rel (%p215) target = $region40
        $region39: #{tpu_custom_call.1} parent=31 // pred_region
          %218 = dma.done [#allocation6], 16384
        $region40: #{tpu_custom_call.1} parent=31 // pred_fallthru
          _
        %s219 = sand.u32 %s41, 1
        %s220 = scalar_lea.sflag [#allocation3], %s219
        %s221 = sand.u32 %s41, 1
        %s222 = smul.addr %s221, 512
        %s223 = scalar_lea.vmem [#allocation2], %s222
        %p224 = pneg %p54
        %p225 = pneg %p51
        %p226 = pneg %p80
        %p227 = pneg %p77
        %s228 = smul.u32 4, %s26
        %p229 = scmp.lt.s32.totalorder %s228, 3
        %s230 = scalar_select %p229, %s228, 3
        %s231 = scalar_lea.vmem %s2, %s230
        %p232 = pneg %p106
        %p233 = pneg %p103
        %p234 = pneg %p134
        %p235 = pneg %p131
        %s236 = sand.u32 %s121, 1
        %s237 = scalar_lea.sflag [#allocation4], %s236
        %s238 = sand.u32 %s121, 1
        %s239 = smul.addr %s238, 1024
        %s240 = scalar_lea.vmem [#allocation7], %s239
        %s241 = smul.u32 32, %s25
        %s242 = smul.u32 4, %s26
        %s243 = smul.u32 4, %s26
        %p244 = scmp.lt.s32.totalorder %s243, 3
        %s245 = scalar_select %p244, %s243, 3
        %s246 = scalar_lea.vmem %s2, %s245
        %s247 = smul.u32 4, %s26
        %s248 = smul.u32 32, %s25
        %s249 = smul.u32 4, %s26
        %v250 = vld [vmem:[%s210] sm:$0xff]
        %v251 = vld [vmem:[%s210 + $0x8] sm:$0xff]
        %v252 = vld [vmem:[%s210 + $0x10] sm:$0xff]
        %v253 = vld [vmem:[%s210 + $0x18] sm:$0xff]
        %v254 = vld [vmem:[%s210 + $0x20] sm:$0xff]
        %v255 = vld [vmem:[%s210 + $0x28] sm:$0xff]
        %v256 = vld [vmem:[%s210 + $0x30] sm:$0xff]
        %v257 = vld [vmem:[%s210 + $0x38] sm:$0xff]
        %v258 = vld [vmem:[%s210 + $0x40] sm:$0xff]
        %v259 = vld [vmem:[%s210 + $0x48] sm:$0xff]
        %v260 = vld [vmem:[%s210 + $0x50] sm:$0xff]
        %v261 = vld [vmem:[%s210 + $0x58] sm:$0xff]
        %v262 = vld [vmem:[%s210 + $0x60] sm:$0xff]
        %v263 = vld [vmem:[%s210 + $0x68] sm:$0xff]
        %v264 = vld [vmem:[%s210 + $0x70] sm:$0xff]
        %v265 = vld [vmem:[%s210 + $0x78] sm:$0xff]
        %v266 = vld [vmem:[%s210 + $0x80] sm:$0xff]
        %v267 = vld [vmem:[%s210 + $0x88] sm:$0xff]
        %v268 = vld [vmem:[%s210 + $0x90] sm:$0xff]
        %v269 = vld [vmem:[%s210 + $0x98] sm:$0xff]
        %v270 = vld [vmem:[%s210 + $0xa0] sm:$0xff]
        %v271 = vld [vmem:[%s210 + $0xa8] sm:$0xff]
        %v272 = vld [vmem:[%s210 + $0xb0] sm:$0xff]
        %v273 = vld [vmem:[%s210 + $0xb8] sm:$0xff]
        %v274 = vld [vmem:[%s210 + $0xc0] sm:$0xff]
        %v275 = vld [vmem:[%s210 + $0xc8] sm:$0xff]
        %v276 = vld [vmem:[%s210 + $0xd0] sm:$0xff]
        %v277 = vld [vmem:[%s210 + $0xd8] sm:$0xff]
        %v278 = vld [vmem:[%s210 + $0xe0] sm:$0xff]
        %v279 = vld [vmem:[%s210 + $0xe8] sm:$0xff]
        %v280 = vld [vmem:[%s210 + $0xf0] sm:$0xff]
        %v281 = vld [vmem:[%s210 + $0xf8] sm:$0xff]
        %v282 = vld [vmem:[%s210 + $0x100] sm:$0xff]
        %v283 = vld [vmem:[%s210 + $0x108] sm:$0xff]
        %v284 = vld [vmem:[%s210 + $0x110] sm:$0xff]
        %v285 = vld [vmem:[%s210 + $0x118] sm:$0xff]
        %v286 = vld [vmem:[%s210 + $0x120] sm:$0xff]
        %v287 = vld [vmem:[%s210 + $0x128] sm:$0xff]
        %v288 = vld [vmem:[%s210 + $0x130] sm:$0xff]
        %v289 = vld [vmem:[%s210 + $0x138] sm:$0xff]
        %v290 = vld [vmem:[%s210 + $0x140] sm:$0xff]
        %v291 = vld [vmem:[%s210 + $0x148] sm:$0xff]
        %v292 = vld [vmem:[%s210 + $0x150] sm:$0xff]
        %v293 = vld [vmem:[%s210 + $0x158] sm:$0xff]
        %v294 = vld [vmem:[%s210 + $0x160] sm:$0xff]
        %v295 = vld [vmem:[%s210 + $0x168] sm:$0xff]
        %v296 = vld [vmem:[%s210 + $0x170] sm:$0xff]
        %v297 = vld [vmem:[%s210 + $0x178] sm:$0xff]
        %v298 = vld [vmem:[%s210 + $0x180] sm:$0xff]
        %v299 = vld [vmem:[%s210 + $0x188] sm:$0xff]
        %v300 = vld [vmem:[%s210 + $0x190] sm:$0xff]
        %v301 = vld [vmem:[%s210 + $0x198] sm:$0xff]
        %v302 = vld [vmem:[%s210 + $0x1a0] sm:$0xff]
        %v303 = vld [vmem:[%s210 + $0x1a8] sm:$0xff]
        %v304 = vld [vmem:[%s210 + $0x1b0] sm:$0xff]
        %v305 = vld [vmem:[%s210 + $0x1b8] sm:$0xff]
        %v306 = vld [vmem:[%s210 + $0x1c0] sm:$0xff]
        %v307 = vld [vmem:[%s210 + $0x1c8] sm:$0xff]
        %v308 = vld [vmem:[%s210 + $0x1d0] sm:$0xff]
        %v309 = vld [vmem:[%s210 + $0x1d8] sm:$0xff]
        %v310 = vld [vmem:[%s210 + $0x1e0] sm:$0xff]
        %v311 = vld [vmem:[%s210 + $0x1e8] sm:$0xff]
        %v312 = vld [vmem:[%s210 + $0x1f0] sm:$0xff]
        %v313 = vld [vmem:[%s210 + $0x1f8] sm:$0xff]
        %v314 = vld [vmem:[#allocation5] sm:$0xff]
        %v315 = vld [vmem:[#allocation5 + $0x8] sm:$0xff]
        %v316 = vld [vmem:[#allocation5 + $0x10] sm:$0xff]
        %v317 = vld [vmem:[#allocation5 + $0x18] sm:$0xff]
        %v318 = vld [vmem:[#allocation5 + $0x20] sm:$0xff]
        %v319 = vld [vmem:[#allocation5 + $0x28] sm:$0xff]
        %v320 = vld [vmem:[#allocation5 + $0x30] sm:$0xff]
        %v321 = vld [vmem:[#allocation5 + $0x38] sm:$0xff]
        %v322 = vld [vmem:[#allocation5 + $0x40] sm:$0xff]
        %v323 = vld [vmem:[#allocation5 + $0x48] sm:$0xff]
        %v324 = vld [vmem:[#allocation5 + $0x50] sm:$0xff]
        %v325 = vld [vmem:[#allocation5 + $0x58] sm:$0xff]
        %v326 = vld [vmem:[#allocation5 + $0x60] sm:$0xff]
        %v327 = vld [vmem:[#allocation5 + $0x68] sm:$0xff]
        %v328 = vld [vmem:[#allocation5 + $0x70] sm:$0xff]
        %v329 = vld [vmem:[#allocation5 + $0x78] sm:$0xff]
        %v330 = vld [vmem:[#allocation5 + $0x80] sm:$0xff]
        %v331 = vld [vmem:[#allocation5 + $0x88] sm:$0xff]
        %v332 = vld [vmem:[#allocation5 + $0x90] sm:$0xff]
        %v333 = vld [vmem:[#allocation5 + $0x98] sm:$0xff]
        %v334 = vld [vmem:[#allocation5 + $0xa0] sm:$0xff]
        %v335 = vld [vmem:[#allocation5 + $0xa8] sm:$0xff]
        %v336 = vld [vmem:[#allocation5 + $0xb0] sm:$0xff]
        %v337 = vld [vmem:[#allocation5 + $0xb8] sm:$0xff]
        %v338 = vld [vmem:[#allocation5 + $0xc0] sm:$0xff]
        %v339 = vld [vmem:[#allocation5 + $0xc8] sm:$0xff]
        %v340 = vld [vmem:[#allocation5 + $0xd0] sm:$0xff]
        %v341 = vld [vmem:[#allocation5 + $0xd8] sm:$0xff]
        %v342 = vld [vmem:[#allocation5 + $0xe0] sm:$0xff]
        %v343 = vld [vmem:[#allocation5 + $0xe8] sm:$0xff]
        %v344 = vld [vmem:[#allocation5 + $0xf0] sm:$0xff]
        %v345 = vld [vmem:[#allocation5 + $0xf8] sm:$0xff]
        %v346 = vld [vmem:[#allocation5 + $0x100] sm:$0xff]
        %v347 = vld [vmem:[#allocation5 + $0x108] sm:$0xff]
        %v348 = vld [vmem:[#allocation5 + $0x110] sm:$0xff]
        %v349 = vld [vmem:[#allocation5 + $0x118] sm:$0xff]
        %v350 = vld [vmem:[#allocation5 + $0x120] sm:$0xff]
        %v351 = vld [vmem:[#allocation5 + $0x128] sm:$0xff]
        %v352 = vld [vmem:[#allocation5 + $0x130] sm:$0xff]
        %v353 = vld [vmem:[#allocation5 + $0x138] sm:$0xff]
        %v354 = vld [vmem:[#allocation5 + $0x140] sm:$0xff]
        %v355 = vld [vmem:[#allocation5 + $0x148] sm:$0xff]
        %v356 = vld [vmem:[#allocation5 + $0x150] sm:$0xff]
        %v357 = vld [vmem:[#allocation5 + $0x158] sm:$0xff]
        %v358 = vld [vmem:[#allocation5 + $0x160] sm:$0xff]
        %v359 = vld [vmem:[#allocation5 + $0x168] sm:$0xff]
        %v360 = vld [vmem:[#allocation5 + $0x170] sm:$0xff]
        %v361 = vld [vmem:[#allocation5 + $0x178] sm:$0xff]
        %v362 = vld [vmem:[#allocation5 + $0x180] sm:$0xff]
        %v363 = vld [vmem:[#allocation5 + $0x188] sm:$0xff]
        %v364 = vld [vmem:[#allocation5 + $0x190] sm:$0xff]
        %v365 = vld [vmem:[#allocation5 + $0x198] sm:$0xff]
        %v366 = vld [vmem:[#allocation5 + $0x1a0] sm:$0xff]
        %v367 = vld [vmem:[#allocation5 + $0x1a8] sm:$0xff]
        %v368 = vld [vmem:[#allocation5 + $0x1b0] sm:$0xff]
        %v369 = vld [vmem:[#allocation5 + $0x1b8] sm:$0xff]
        %v370 = vld [vmem:[#allocation5 + $0x1c0] sm:$0xff]
        %v371 = vld [vmem:[#allocation5 + $0x1c8] sm:$0xff]
        %v372 = vld [vmem:[#allocation5 + $0x1d0] sm:$0xff]
        %v373 = vld [vmem:[#allocation5 + $0x1d8] sm:$0xff]
        %v374 = vld [vmem:[#allocation5 + $0x1e0] sm:$0xff]
        %v375 = vld [vmem:[#allocation5 + $0x1e8] sm:$0xff]
        %v376 = vld [vmem:[#allocation5 + $0x1f0] sm:$0xff]
        %v377 = vld [vmem:[#allocation5 + $0x1f8] sm:$0xff]
        %v378 = vld [vmem:[#allocation5 + $0x200] sm:$0xff]
        %v379 = vld [vmem:[#allocation5 + $0x208] sm:$0xff]
        %v380 = vld [vmem:[#allocation5 + $0x210] sm:$0xff]
        %v381 = vld [vmem:[#allocation5 + $0x218] sm:$0xff]
        %v382 = vld [vmem:[#allocation5 + $0x220] sm:$0xff]
        %v383 = vld [vmem:[#allocation5 + $0x228] sm:$0xff]
        %v384 = vld [vmem:[#allocation5 + $0x230] sm:$0xff]
        %v385 = vld [vmem:[#allocation5 + $0x238] sm:$0xff]
        %v386 = vld [vmem:[#allocation5 + $0x240] sm:$0xff]
        %v387 = vld [vmem:[#allocation5 + $0x248] sm:$0xff]
        %v388 = vld [vmem:[#allocation5 + $0x250] sm:$0xff]
        %v389 = vld [vmem:[#allocation5 + $0x258] sm:$0xff]
        %v390 = vld [vmem:[#allocation5 + $0x260] sm:$0xff]
        %v391 = vld [vmem:[#allocation5 + $0x268] sm:$0xff]
        %v392 = vld [vmem:[#allocation5 + $0x270] sm:$0xff]
        %v393 = vld [vmem:[#allocation5 + $0x278] sm:$0xff]
        %v394 = vld [vmem:[#allocation5 + $0x280] sm:$0xff]
        %v395 = vld [vmem:[#allocation5 + $0x288] sm:$0xff]
        %v396 = vld [vmem:[#allocation5 + $0x290] sm:$0xff]
        %v397 = vld [vmem:[#allocation5 + $0x298] sm:$0xff]
        %v398 = vld [vmem:[#allocation5 + $0x2a0] sm:$0xff]
        %v399 = vld [vmem:[#allocation5 + $0x2a8] sm:$0xff]
        %v400 = vld [vmem:[#allocation5 + $0x2b0] sm:$0xff]
        %v401 = vld [vmem:[#allocation5 + $0x2b8] sm:$0xff]
        %v402 = vld [vmem:[#allocation5 + $0x2c0] sm:$0xff]
        %v403 = vld [vmem:[#allocation5 + $0x2c8] sm:$0xff]
        %v404 = vld [vmem:[#allocation5 + $0x2d0] sm:$0xff]
        %v405 = vld [vmem:[#allocation5 + $0x2d8] sm:$0xff]
        %v406 = vld [vmem:[#allocation5 + $0x2e0] sm:$0xff]
        %v407 = vld [vmem:[#allocation5 + $0x2e8] sm:$0xff]
        %v408 = vld [vmem:[#allocation5 + $0x2f0] sm:$0xff]
        %v409 = vld [vmem:[#allocation5 + $0x2f8] sm:$0xff]
        %v410 = vld [vmem:[#allocation5 + $0x300] sm:$0xff]
        %v411 = vld [vmem:[#allocation5 + $0x308] sm:$0xff]
        %v412 = vld [vmem:[#allocation5 + $0x310] sm:$0xff]
        %v413 = vld [vmem:[#allocation5 + $0x318] sm:$0xff]
        %v414 = vld [vmem:[#allocation5 + $0x320] sm:$0xff]
        %v415 = vld [vmem:[#allocation5 + $0x328] sm:$0xff]
        %v416 = vld [vmem:[#allocation5 + $0x330] sm:$0xff]
        %v417 = vld [vmem:[#allocation5 + $0x338] sm:$0xff]
        %v418 = vld [vmem:[#allocation5 + $0x340] sm:$0xff]
        %v419 = vld [vmem:[#allocation5 + $0x348] sm:$0xff]
        %v420 = vld [vmem:[#allocation5 + $0x350] sm:$0xff]
        %v421 = vld [vmem:[#allocation5 + $0x358] sm:$0xff]
        %v422 = vld [vmem:[#allocation5 + $0x360] sm:$0xff]
        %v423 = vld [vmem:[#allocation5 + $0x368] sm:$0xff]
        %v424 = vld [vmem:[#allocation5 + $0x370] sm:$0xff]
        %v425 = vld [vmem:[#allocation5 + $0x378] sm:$0xff]
        %v426 = vld [vmem:[#allocation5 + $0x380] sm:$0xff]
        %v427 = vld [vmem:[#allocation5 + $0x388] sm:$0xff]
        %v428 = vld [vmem:[#allocation5 + $0x390] sm:$0xff]
        %v429 = vld [vmem:[#allocation5 + $0x398] sm:$0xff]
        %v430 = vld [vmem:[#allocation5 + $0x3a0] sm:$0xff]
        %v431 = vld [vmem:[#allocation5 + $0x3a8] sm:$0xff]
        %v432 = vld [vmem:[#allocation5 + $0x3b0] sm:$0xff]
        %v433 = vld [vmem:[#allocation5 + $0x3b8] sm:$0xff]
        %v434 = vld [vmem:[#allocation5 + $0x3c0] sm:$0xff]
        %v435 = vld [vmem:[#allocation5 + $0x3c8] sm:$0xff]
        %v436 = vld [vmem:[#allocation5 + $0x3d0] sm:$0xff]
        %v437 = vld [vmem:[#allocation5 + $0x3d8] sm:$0xff]
        %v438 = vld [vmem:[#allocation5 + $0x3e0] sm:$0xff]
        %v439 = vld [vmem:[#allocation5 + $0x3e8] sm:$0xff]
        %v440 = vld [vmem:[#allocation5 + $0x3f0] sm:$0xff]
        %v441 = vld [vmem:[#allocation5 + $0x3f8] sm:$0xff]
        %v442 = vld [vmem:[%s246] sm:$0xf]
        %v444 = vlaneseq
        %v445 = vshrl.u32 %v444, 7
        %v446 = vsub.s32 0, %v445
        %v447 = vrot.slane %v442, %v446
        %v448 = vlaneseq
        %v449 = vshrl.u32 %v448, 7
        %v450 = vsub.s32 1, %v449
        %v451 = vrot.slane %v442, %v450
        %v452 = vlaneseq
        %v453 = vshrl.u32 %v452, 7
        %v454 = vsub.s32 2, %v453
        %v455 = vrot.slane %v442, %v454
        %v456 = vlaneseq
        %v457 = vshrl.u32 %v456, 7
        %v458 = vsub.s32 3, %v457
        %v459 = vrot.slane %v442, %v458
        %v528 = vunpack.c.l.b16 %v250
        %v529 = vunpack.c.h.b16 %v250
        %v530 = vunpack.c.l.b16 %v251
        %v531 = vunpack.c.h.b16 %v251
        %v532 = vunpack.c.l.b16 %v252
        %v533 = vunpack.c.h.b16 %v252
        %v534 = vunpack.c.l.b16 %v253
        %v535 = vunpack.c.h.b16 %v253
        %v536 = vunpack.c.l.b16 %v254
        %v537 = vunpack.c.h.b16 %v254
        %v538 = vunpack.c.l.b16 %v255
        %v539 = vunpack.c.h.b16 %v255
        %v540 = vunpack.c.l.b16 %v256
        %v541 = vunpack.c.h.b16 %v256
        %v542 = vunpack.c.l.b16 %v257
        %v543 = vunpack.c.h.b16 %v257
        %v544 = vunpack.c.l.b16 %v258
        %v545 = vunpack.c.h.b16 %v258
        %v546 = vunpack.c.l.b16 %v259
        %v547 = vunpack.c.h.b16 %v259
        %v548 = vunpack.c.l.b16 %v260
        %v549 = vunpack.c.h.b16 %v260
        %v550 = vunpack.c.l.b16 %v261
        %v551 = vunpack.c.h.b16 %v261
        %v552 = vunpack.c.l.b16 %v262
        %v553 = vunpack.c.h.b16 %v262
        %v554 = vunpack.c.l.b16 %v263
        %v555 = vunpack.c.h.b16 %v263
        %v556 = vunpack.c.l.b16 %v264
        %v557 = vunpack.c.h.b16 %v264
        %v558 = vunpack.c.l.b16 %v265
        %v559 = vunpack.c.h.b16 %v265
        %v560 = vunpack.c.l.b16 %v266
        %v561 = vunpack.c.h.b16 %v266
        %v562 = vunpack.c.l.b16 %v267
        %v563 = vunpack.c.h.b16 %v267
        %v564 = vunpack.c.l.b16 %v268
        %v565 = vunpack.c.h.b16 %v268
        %v566 = vunpack.c.l.b16 %v269
        %v567 = vunpack.c.h.b16 %v269
        %v568 = vunpack.c.l.b16 %v270
        %v569 = vunpack.c.h.b16 %v270
        %v570 = vunpack.c.l.b16 %v271
        %v571 = vunpack.c.h.b16 %v271
        %v572 = vunpack.c.l.b16 %v272
        %v573 = vunpack.c.h.b16 %v272
        %v574 = vunpack.c.l.b16 %v273
        %v575 = vunpack.c.h.b16 %v273
        %v576 = vunpack.c.l.b16 %v274
        %v577 = vunpack.c.h.b16 %v274
        %v578 = vunpack.c.l.b16 %v275
        %v579 = vunpack.c.h.b16 %v275
        %v580 = vunpack.c.l.b16 %v276
        %v581 = vunpack.c.h.b16 %v276
        %v582 = vunpack.c.l.b16 %v277
        %v583 = vunpack.c.h.b16 %v277
        %v584 = vunpack.c.l.b16 %v278
        %v585 = vunpack.c.h.b16 %v278
        %v586 = vunpack.c.l.b16 %v279
        %v587 = vunpack.c.h.b16 %v279
        %v588 = vunpack.c.l.b16 %v280
        %v589 = vunpack.c.h.b16 %v280
        %v590 = vunpack.c.l.b16 %v281
        %v591 = vunpack.c.h.b16 %v281
        %v592 = vunpack.c.l.b16 %v282
        %v593 = vunpack.c.h.b16 %v282
        %v594 = vunpack.c.l.b16 %v283
        %v595 = vunpack.c.h.b16 %v283
        %v596 = vunpack.c.l.b16 %v284
        %v597 = vunpack.c.h.b16 %v284
        %v598 = vunpack.c.l.b16 %v285
        %v599 = vunpack.c.h.b16 %v285
        %v600 = vunpack.c.l.b16 %v286
        %v601 = vunpack.c.h.b16 %v286
        %v602 = vunpack.c.l.b16 %v287
        %v603 = vunpack.c.h.b16 %v287
        %v604 = vunpack.c.l.b16 %v288
        %v605 = vunpack.c.h.b16 %v288
        %v606 = vunpack.c.l.b16 %v289
        %v607 = vunpack.c.h.b16 %v289
        %v608 = vunpack.c.l.b16 %v290
        %v609 = vunpack.c.h.b16 %v290
        %v610 = vunpack.c.l.b16 %v291
        %v611 = vunpack.c.h.b16 %v291
        %v612 = vunpack.c.l.b16 %v292
        %v613 = vunpack.c.h.b16 %v292
        %v614 = vunpack.c.l.b16 %v293
        %v615 = vunpack.c.h.b16 %v293
        %v616 = vunpack.c.l.b16 %v294
        %v617 = vunpack.c.h.b16 %v294
        %v618 = vunpack.c.l.b16 %v295
        %v619 = vunpack.c.h.b16 %v295
        %v620 = vunpack.c.l.b16 %v296
        %v621 = vunpack.c.h.b16 %v296
        %v622 = vunpack.c.l.b16 %v297
        %v623 = vunpack.c.h.b16 %v297
        %v624 = vunpack.c.l.b16 %v298
        %v625 = vunpack.c.h.b16 %v298
        %v626 = vunpack.c.l.b16 %v299
        %v627 = vunpack.c.h.b16 %v299
        %v628 = vunpack.c.l.b16 %v300
        %v629 = vunpack.c.h.b16 %v300
        %v630 = vunpack.c.l.b16 %v301
        %v631 = vunpack.c.h.b16 %v301
        %v632 = vunpack.c.l.b16 %v302
        %v633 = vunpack.c.h.b16 %v302
        %v634 = vunpack.c.l.b16 %v303
        %v635 = vunpack.c.h.b16 %v303
        %v636 = vunpack.c.l.b16 %v304
        %v637 = vunpack.c.h.b16 %v304
        %v638 = vunpack.c.l.b16 %v305
        %v639 = vunpack.c.h.b16 %v305
        %v640 = vunpack.c.l.b16 %v306
        %v641 = vunpack.c.h.b16 %v306
        %v642 = vunpack.c.l.b16 %v307
        %v643 = vunpack.c.h.b16 %v307
        %v644 = vunpack.c.l.b16 %v308
        %v645 = vunpack.c.h.b16 %v308
        %v646 = vunpack.c.l.b16 %v309
        %v647 = vunpack.c.h.b16 %v309
        %v648 = vunpack.c.l.b16 %v310
        %v649 = vunpack.c.h.b16 %v310
        %v650 = vunpack.c.l.b16 %v311
        %v651 = vunpack.c.h.b16 %v311
        %v652 = vunpack.c.l.b16 %v312
        %v653 = vunpack.c.h.b16 %v312
        %v654 = vunpack.c.l.b16 %v313
        %v655 = vunpack.c.h.b16 %v313
        %v656 = vpack.c.b16 %v532, %v528
        %v657 = vpack.c.b16 %v533, %v529
        %v658 = vpack.c.b16 %v534, %v530
        %v659 = vpack.c.b16 %v535, %v531
        %v660 = vpack.c.b16 %v540, %v536
        %v661 = vpack.c.b16 %v541, %v537
        %v662 = vpack.c.b16 %v542, %v538
        %v663 = vpack.c.b16 %v543, %v539
        %v664 = vpack.c.b16 %v548, %v544
        %v665 = vpack.c.b16 %v549, %v545
        %v666 = vpack.c.b16 %v550, %v546
        %v667 = vpack.c.b16 %v551, %v547
        %v668 = vpack.c.b16 %v556, %v552
        %v669 = vpack.c.b16 %v557, %v553
        %v670 = vpack.c.b16 %v558, %v554
        %v671 = vpack.c.b16 %v559, %v555
        %v672 = vpack.c.b16 %v564, %v560
        %v673 = vpack.c.b16 %v565, %v561
        %v674 = vpack.c.b16 %v566, %v562
        %v675 = vpack.c.b16 %v567, %v563
        %v676 = vpack.c.b16 %v572, %v568
        %v677 = vpack.c.b16 %v573, %v569
        %v678 = vpack.c.b16 %v574, %v570
        %v679 = vpack.c.b16 %v575, %v571
        %v680 = vpack.c.b16 %v580, %v576
        %v681 = vpack.c.b16 %v581, %v577
        %v682 = vpack.c.b16 %v582, %v578
        %v683 = vpack.c.b16 %v583, %v579
        %v684 = vpack.c.b16 %v588, %v584
        %v685 = vpack.c.b16 %v589, %v585
        %v686 = vpack.c.b16 %v590, %v586
        %v687 = vpack.c.b16 %v591, %v587
        %v688 = vpack.c.b16 %v596, %v592
        %v689 = vpack.c.b16 %v597, %v593
        %v690 = vpack.c.b16 %v598, %v594
        %v691 = vpack.c.b16 %v599, %v595
        %v692 = vpack.c.b16 %v604, %v600
        %v693 = vpack.c.b16 %v605, %v601
        %v694 = vpack.c.b16 %v606, %v602
        %v695 = vpack.c.b16 %v607, %v603
        %v696 = vpack.c.b16 %v612, %v608
        %v697 = vpack.c.b16 %v613, %v609
        %v698 = vpack.c.b16 %v614, %v610
        %v699 = vpack.c.b16 %v615, %v611
        %v700 = vpack.c.b16 %v620, %v616
        %v701 = vpack.c.b16 %v621, %v617
        %v702 = vpack.c.b16 %v622, %v618
        %v703 = vpack.c.b16 %v623, %v619
        %v704 = vpack.c.b16 %v628, %v624
        %v705 = vpack.c.b16 %v629, %v625
        %v706 = vpack.c.b16 %v630, %v626
        %v707 = vpack.c.b16 %v631, %v627
        %v708 = vpack.c.b16 %v636, %v632
        %v709 = vpack.c.b16 %v637, %v633
        %v710 = vpack.c.b16 %v638, %v634
        %v711 = vpack.c.b16 %v639, %v635
        %v712 = vpack.c.b16 %v644, %v640
        %v713 = vpack.c.b16 %v645, %v641
        %v714 = vpack.c.b16 %v646, %v642
        %v715 = vpack.c.b16 %v647, %v643
        %v716 = vpack.c.b16 %v652, %v648
        %v717 = vpack.c.b16 %v653, %v649
        %v718 = vpack.c.b16 %v654, %v650
        %v719 = vpack.c.b16 %v655, %v651
        %v912 = vunpack.c.l.b16 %v314
        %v913 = vunpack.c.h.b16 %v314
        %v914 = vunpack.c.l.b16 %v315
        %v915 = vunpack.c.h.b16 %v315
        %v916 = vunpack.c.l.b16 %v316
        %v917 = vunpack.c.h.b16 %v316
        %v918 = vunpack.c.l.b16 %v317
        %v919 = vunpack.c.h.b16 %v317
        %v920 = vunpack.c.l.b16 %v318
        %v921 = vunpack.c.h.b16 %v318
        %v922 = vunpack.c.l.b16 %v319
        %v923 = vunpack.c.h.b16 %v319
        %v924 = vunpack.c.l.b16 %v320
        %v925 = vunpack.c.h.b16 %v320
        %v926 = vunpack.c.l.b16 %v321
        %v927 = vunpack.c.h.b16 %v321
        %v928 = vunpack.c.l.b16 %v322
        %v929 = vunpack.c.h.b16 %v322
        %v930 = vunpack.c.l.b16 %v323
        %v931 = vunpack.c.h.b16 %v323
        %v932 = vunpack.c.l.b16 %v324
        %v933 = vunpack.c.h.b16 %v324
        %v934 = vunpack.c.l.b16 %v325
        %v935 = vunpack.c.h.b16 %v325
        %v936 = vunpack.c.l.b16 %v326
        %v937 = vunpack.c.h.b16 %v326
        %v938 = vunpack.c.l.b16 %v327
        %v939 = vunpack.c.h.b16 %v327
        %v940 = vunpack.c.l.b16 %v328
        %v941 = vunpack.c.h.b16 %v328
        %v942 = vunpack.c.l.b16 %v329
        %v943 = vunpack.c.h.b16 %v329
        %v944 = vunpack.c.l.b16 %v330
        %v945 = vunpack.c.h.b16 %v330
        %v946 = vunpack.c.l.b16 %v331
        %v947 = vunpack.c.h.b16 %v331
        %v948 = vunpack.c.l.b16 %v332
        %v949 = vunpack.c.h.b16 %v332
        %v950 = vunpack.c.l.b16 %v333
        %v951 = vunpack.c.h.b16 %v333
        %v952 = vunpack.c.l.b16 %v334
        %v953 = vunpack.c.h.b16 %v334
        %v954 = vunpack.c.l.b16 %v335
        %v955 = vunpack.c.h.b16 %v335
        %v956 = vunpack.c.l.b16 %v336
        %v957 = vunpack.c.h.b16 %v336
        %v958 = vunpack.c.l.b16 %v337
        %v959 = vunpack.c.h.b16 %v337
        %v960 = vunpack.c.l.b16 %v338
        %v961 = vunpack.c.h.b16 %v338
        %v962 = vunpack.c.l.b16 %v339
        %v963 = vunpack.c.h.b16 %v339
        %v964 = vunpack.c.l.b16 %v340
        %v965 = vunpack.c.h.b16 %v340
        %v966 = vunpack.c.l.b16 %v341
        %v967 = vunpack.c.h.b16 %v341
        %v968 = vunpack.c.l.b16 %v342
        %v969 = vunpack.c.h.b16 %v342
        %v970 = vunpack.c.l.b16 %v343
        %v971 = vunpack.c.h.b16 %v343
        %v972 = vunpack.c.l.b16 %v344
        %v973 = vunpack.c.h.b16 %v344
        %v974 = vunpack.c.l.b16 %v345
        %v975 = vunpack.c.h.b16 %v345
        %v976 = vunpack.c.l.b16 %v346
        %v977 = vunpack.c.h.b16 %v346
        %v978 = vunpack.c.l.b16 %v347
        %v979 = vunpack.c.h.b16 %v347
        %v980 = vunpack.c.l.b16 %v348
        %v981 = vunpack.c.h.b16 %v348
        %v982 = vunpack.c.l.b16 %v349
        %v983 = vunpack.c.h.b16 %v349
        %v984 = vunpack.c.l.b16 %v350
        %v985 = vunpack.c.h.b16 %v350
        %v986 = vunpack.c.l.b16 %v351
        %v987 = vunpack.c.h.b16 %v351
        %v988 = vunpack.c.l.b16 %v352
        %v989 = vunpack.c.h.b16 %v352
        %v990 = vunpack.c.l.b16 %v353
        %v991 = vunpack.c.h.b16 %v353
        %v992 = vunpack.c.l.b16 %v354
        %v993 = vunpack.c.h.b16 %v354
        %v994 = vunpack.c.l.b16 %v355
        %v995 = vunpack.c.h.b16 %v355
        %v996 = vunpack.c.l.b16 %v356
        %v997 = vunpack.c.h.b16 %v356
        %v998 = vunpack.c.l.b16 %v357
        %v999 = vunpack.c.h.b16 %v357
        %v1000 = vunpack.c.l.b16 %v358
        %v1001 = vunpack.c.h.b16 %v358
        %v1002 = vunpack.c.l.b16 %v359
        %v1003 = vunpack.c.h.b16 %v359
        %v1004 = vunpack.c.l.b16 %v360
        %v1005 = vunpack.c.h.b16 %v360
        %v1006 = vunpack.c.l.b16 %v361
        %v1007 = vunpack.c.h.b16 %v361
        %v1008 = vunpack.c.l.b16 %v362
        %v1009 = vunpack.c.h.b16 %v362
        %v1010 = vunpack.c.l.b16 %v363
        %v1011 = vunpack.c.h.b16 %v363
        %v1012 = vunpack.c.l.b16 %v364
        %v1013 = vunpack.c.h.b16 %v364
        %v1014 = vunpack.c.l.b16 %v365
        %v1015 = vunpack.c.h.b16 %v365
        %v1016 = vunpack.c.l.b16 %v366
        %v1017 = vunpack.c.h.b16 %v366
        %v1018 = vunpack.c.l.b16 %v367
        %v1019 = vunpack.c.h.b16 %v367
        %v1020 = vunpack.c.l.b16 %v368
        %v1021 = vunpack.c.h.b16 %v368
        %v1022 = vunpack.c.l.b16 %v369
        %v1023 = vunpack.c.h.b16 %v369
        %v1024 = vunpack.c.l.b16 %v370
        %v1025 = vunpack.c.h.b16 %v370
        %v1026 = vunpack.c.l.b16 %v371
        %v1027 = vunpack.c.h.b16 %v371
        %v1028 = vunpack.c.l.b16 %v372
        %v1029 = vunpack.c.h.b16 %v372
        %v1030 = vunpack.c.l.b16 %v373
        %v1031 = vunpack.c.h.b16 %v373
        %v1032 = vunpack.c.l.b16 %v374
        %v1033 = vunpack.c.h.b16 %v374
        %v1034 = vunpack.c.l.b16 %v375
        %v1035 = vunpack.c.h.b16 %v375
        %v1036 = vunpack.c.l.b16 %v376
        %v1037 = vunpack.c.h.b16 %v376
        %v1038 = vunpack.c.l.b16 %v377
        %v1039 = vunpack.c.h.b16 %v377
        %v1040 = vunpack.c.l.b16 %v378
        %v1041 = vunpack.c.h.b16 %v378
        %v1042 = vunpack.c.l.b16 %v379
        %v1043 = vunpack.c.h.b16 %v379
        %v1044 = vunpack.c.l.b16 %v380
        %v1045 = vunpack.c.h.b16 %v380
        %v1046 = vunpack.c.l.b16 %v381
        %v1047 = vunpack.c.h.b16 %v381
        %v1048 = vunpack.c.l.b16 %v382
        %v1049 = vunpack.c.h.b16 %v382
        %v1050 = vunpack.c.l.b16 %v383
        %v1051 = vunpack.c.h.b16 %v383
        %v1052 = vunpack.c.l.b16 %v384
        %v1053 = vunpack.c.h.b16 %v384
        %v1054 = vunpack.c.l.b16 %v385
        %v1055 = vunpack.c.h.b16 %v385
        %v1056 = vunpack.c.l.b16 %v386
        %v1057 = vunpack.c.h.b16 %v386
        %v1058 = vunpack.c.l.b16 %v387
        %v1059 = vunpack.c.h.b16 %v387
        %v1060 = vunpack.c.l.b16 %v388
        %v1061 = vunpack.c.h.b16 %v388
        %v1062 = vunpack.c.l.b16 %v389
        %v1063 = vunpack.c.h.b16 %v389
        %v1064 = vunpack.c.l.b16 %v390
        %v1065 = vunpack.c.h.b16 %v390
        %v1066 = vunpack.c.l.b16 %v391
        %v1067 = vunpack.c.h.b16 %v391
        %v1068 = vunpack.c.l.b16 %v392
        %v1069 = vunpack.c.h.b16 %v392
        %v1070 = vunpack.c.l.b16 %v393
        %v1071 = vunpack.c.h.b16 %v393
        %v1072 = vunpack.c.l.b16 %v394
        %v1073 = vunpack.c.h.b16 %v394
        %v1074 = vunpack.c.l.b16 %v395
        %v1075 = vunpack.c.h.b16 %v395
        %v1076 = vunpack.c.l.b16 %v396
        %v1077 = vunpack.c.h.b16 %v396
        %v1078 = vunpack.c.l.b16 %v397
        %v1079 = vunpack.c.h.b16 %v397
        %v1080 = vunpack.c.l.b16 %v398
        %v1081 = vunpack.c.h.b16 %v398
        %v1082 = vunpack.c.l.b16 %v399
        %v1083 = vunpack.c.h.b16 %v399
        %v1084 = vunpack.c.l.b16 %v400
        %v1085 = vunpack.c.h.b16 %v400
        %v1086 = vunpack.c.l.b16 %v401
        %v1087 = vunpack.c.h.b16 %v401
        %v1088 = vunpack.c.l.b16 %v402
        %v1089 = vunpack.c.h.b16 %v402
        %v1090 = vunpack.c.l.b16 %v403
        %v1091 = vunpack.c.h.b16 %v403
        %v1092 = vunpack.c.l.b16 %v404
        %v1093 = vunpack.c.h.b16 %v404
        %v1094 = vunpack.c.l.b16 %v405
        %v1095 = vunpack.c.h.b16 %v405
        %v1096 = vunpack.c.l.b16 %v406
        %v1097 = vunpack.c.h.b16 %v406
        %v1098 = vunpack.c.l.b16 %v407
        %v1099 = vunpack.c.h.b16 %v407
        %v1100 = vunpack.c.l.b16 %v408
        %v1101 = vunpack.c.h.b16 %v408
        %v1102 = vunpack.c.l.b16 %v409
        %v1103 = vunpack.c.h.b16 %v409
        %v1104 = vunpack.c.l.b16 %v410
        %v1105 = vunpack.c.h.b16 %v410
        %v1106 = vunpack.c.l.b16 %v411
        %v1107 = vunpack.c.h.b16 %v411
        %v1108 = vunpack.c.l.b16 %v412
        %v1109 = vunpack.c.h.b16 %v412
        %v1110 = vunpack.c.l.b16 %v413
        %v1111 = vunpack.c.h.b16 %v413
        %v1112 = vunpack.c.l.b16 %v414
        %v1113 = vunpack.c.h.b16 %v414
        %v1114 = vunpack.c.l.b16 %v415
        %v1115 = vunpack.c.h.b16 %v415
        %v1116 = vunpack.c.l.b16 %v416
        %v1117 = vunpack.c.h.b16 %v416
        %v1118 = vunpack.c.l.b16 %v417
        %v1119 = vunpack.c.h.b16 %v417
        %v1120 = vunpack.c.l.b16 %v418
        %v1121 = vunpack.c.h.b16 %v418
        %v1122 = vunpack.c.l.b16 %v419
        %v1123 = vunpack.c.h.b16 %v419
        %v1124 = vunpack.c.l.b16 %v420
        %v1125 = vunpack.c.h.b16 %v420
        %v1126 = vunpack.c.l.b16 %v421
        %v1127 = vunpack.c.h.b16 %v421
        %v1128 = vunpack.c.l.b16 %v422
        %v1129 = vunpack.c.h.b16 %v422
        %v1130 = vunpack.c.l.b16 %v423
        %v1131 = vunpack.c.h.b16 %v423
        %v1132 = vunpack.c.l.b16 %v424
        %v1133 = vunpack.c.h.b16 %v424
        %v1134 = vunpack.c.l.b16 %v425
        %v1135 = vunpack.c.h.b16 %v425
        %v1136 = vunpack.c.l.b16 %v426
        %v1137 = vunpack.c.h.b16 %v426
        %v1138 = vunpack.c.l.b16 %v427
        %v1139 = vunpack.c.h.b16 %v427
        %v1140 = vunpack.c.l.b16 %v428
        %v1141 = vunpack.c.h.b16 %v428
        %v1142 = vunpack.c.l.b16 %v429
        %v1143 = vunpack.c.h.b16 %v429
        %v1144 = vunpack.c.l.b16 %v430
        %v1145 = vunpack.c.h.b16 %v430
        %v1146 = vunpack.c.l.b16 %v431
        %v1147 = vunpack.c.h.b16 %v431
        %v1148 = vunpack.c.l.b16 %v432
        %v1149 = vunpack.c.h.b16 %v432
        %v1150 = vunpack.c.l.b16 %v433
        %v1151 = vunpack.c.h.b16 %v433
        %v1152 = vunpack.c.l.b16 %v434
        %v1153 = vunpack.c.h.b16 %v434
        %v1154 = vunpack.c.l.b16 %v435
        %v1155 = vunpack.c.h.b16 %v435
        %v1156 = vunpack.c.l.b16 %v436
        %v1157 = vunpack.c.h.b16 %v436
        %v1158 = vunpack.c.l.b16 %v437
        %v1159 = vunpack.c.h.b16 %v437
        %v1160 = vunpack.c.l.b16 %v438
        %v1161 = vunpack.c.h.b16 %v438
        %v1162 = vunpack.c.l.b16 %v439
        %v1163 = vunpack.c.h.b16 %v439
        %v1164 = vunpack.c.l.b16 %v440
        %v1165 = vunpack.c.h.b16 %v440
        %v1166 = vunpack.c.l.b16 %v441
        %v1167 = vunpack.c.h.b16 %v441
        %v1168 = vpack.c.b16 %v916, %v912
        %v1169 = vpack.c.b16 %v917, %v913
        %v1170 = vpack.c.b16 %v918, %v914
        %v1171 = vpack.c.b16 %v919, %v915
        %v1172 = vpack.c.b16 %v924, %v920
        %v1173 = vpack.c.b16 %v925, %v921
        %v1174 = vpack.c.b16 %v926, %v922
        %v1175 = vpack.c.b16 %v927, %v923
        %v1176 = vpack.c.b16 %v932, %v928
        %v1177 = vpack.c.b16 %v933, %v929
        %v1178 = vpack.c.b16 %v934, %v930
        %v1179 = vpack.c.b16 %v935, %v931
        %v1180 = vpack.c.b16 %v940, %v936
        %v1181 = vpack.c.b16 %v941, %v937
        %v1182 = vpack.c.b16 %v942, %v938
        %v1183 = vpack.c.b16 %v943, %v939
        %v1184 = vpack.c.b16 %v948, %v944
        %v1185 = vpack.c.b16 %v949, %v945
        %v1186 = vpack.c.b16 %v950, %v946
        %v1187 = vpack.c.b16 %v951, %v947
        %v1188 = vpack.c.b16 %v956, %v952
        %v1189 = vpack.c.b16 %v957, %v953
        %v1190 = vpack.c.b16 %v958, %v954
        %v1191 = vpack.c.b16 %v959, %v955
        %v1192 = vpack.c.b16 %v964, %v960
        %v1193 = vpack.c.b16 %v965, %v961
        %v1194 = vpack.c.b16 %v966, %v962
        %v1195 = vpack.c.b16 %v967, %v963
        %v1196 = vpack.c.b16 %v972, %v968
        %v1197 = vpack.c.b16 %v973, %v969
        %v1198 = vpack.c.b16 %v974, %v970
        %v1199 = vpack.c.b16 %v975, %v971
        %v1200 = vpack.c.b16 %v980, %v976
        %v1201 = vpack.c.b16 %v981, %v977
        %v1202 = vpack.c.b16 %v982, %v978
        %v1203 = vpack.c.b16 %v983, %v979
        %v1204 = vpack.c.b16 %v988, %v984
        %v1205 = vpack.c.b16 %v989, %v985
        %v1206 = vpack.c.b16 %v990, %v986
        %v1207 = vpack.c.b16 %v991, %v987
        %v1208 = vpack.c.b16 %v996, %v992
        %v1209 = vpack.c.b16 %v997, %v993
        %v1210 = vpack.c.b16 %v998, %v994
        %v1211 = vpack.c.b16 %v999, %v995
        %v1212 = vpack.c.b16 %v1004, %v1000
        %v1213 = vpack.c.b16 %v1005, %v1001
        %v1214 = vpack.c.b16 %v1006, %v1002
        %v1215 = vpack.c.b16 %v1007, %v1003
        %v1216 = vpack.c.b16 %v1012, %v1008
        %v1217 = vpack.c.b16 %v1013, %v1009
        %v1218 = vpack.c.b16 %v1014, %v1010
        %v1219 = vpack.c.b16 %v1015, %v1011
        %v1220 = vpack.c.b16 %v1020, %v1016
        %v1221 = vpack.c.b16 %v1021, %v1017
        %v1222 = vpack.c.b16 %v1022, %v1018
        %v1223 = vpack.c.b16 %v1023, %v1019
        %v1224 = vpack.c.b16 %v1028, %v1024
        %v1225 = vpack.c.b16 %v1029, %v1025
        %v1226 = vpack.c.b16 %v1030, %v1026
        %v1227 = vpack.c.b16 %v1031, %v1027
        %v1228 = vpack.c.b16 %v1036, %v1032
        %v1229 = vpack.c.b16 %v1037, %v1033
        %v1230 = vpack.c.b16 %v1038, %v1034
        %v1231 = vpack.c.b16 %v1039, %v1035
        %v1232 = vpack.c.b16 %v1044, %v1040
        %v1233 = vpack.c.b16 %v1045, %v1041
        %v1234 = vpack.c.b16 %v1046, %v1042
        %v1235 = vpack.c.b16 %v1047, %v1043
        %v1236 = vpack.c.b16 %v1052, %v1048
        %v1237 = vpack.c.b16 %v1053, %v1049
        %v1238 = vpack.c.b16 %v1054, %v1050
        %v1239 = vpack.c.b16 %v1055, %v1051
        %v1240 = vpack.c.b16 %v1060, %v1056
        %v1241 = vpack.c.b16 %v1061, %v1057
        %v1242 = vpack.c.b16 %v1062, %v1058
        %v1243 = vpack.c.b16 %v1063, %v1059
        %v1244 = vpack.c.b16 %v1068, %v1064
        %v1245 = vpack.c.b16 %v1069, %v1065
        %v1246 = vpack.c.b16 %v1070, %v1066
        %v1247 = vpack.c.b16 %v1071, %v1067
        %v1248 = vpack.c.b16 %v1076, %v1072
        %v1249 = vpack.c.b16 %v1077, %v1073
        %v1250 = vpack.c.b16 %v1078, %v1074
        %v1251 = vpack.c.b16 %v1079, %v1075
        %v1252 = vpack.c.b16 %v1084, %v1080
        %v1253 = vpack.c.b16 %v1085, %v1081
        %v1254 = vpack.c.b16 %v1086, %v1082
        %v1255 = vpack.c.b16 %v1087, %v1083
        %v1256 = vpack.c.b16 %v1092, %v1088
        %v1257 = vpack.c.b16 %v1093, %v1089
        %v1258 = vpack.c.b16 %v1094, %v1090
        %v1259 = vpack.c.b16 %v1095, %v1091
        %v1260 = vpack.c.b16 %v1100, %v1096
        %v1261 = vpack.c.b16 %v1101, %v1097
        %v1262 = vpack.c.b16 %v1102, %v1098
        %v1263 = vpack.c.b16 %v1103, %v1099
        %v1264 = vpack.c.b16 %v1108, %v1104
        %v1265 = vpack.c.b16 %v1109, %v1105
        %v1266 = vpack.c.b16 %v1110, %v1106
        %v1267 = vpack.c.b16 %v1111, %v1107
        %v1268 = vpack.c.b16 %v1116, %v1112
        %v1269 = vpack.c.b16 %v1117, %v1113
        %v1270 = vpack.c.b16 %v1118, %v1114
        %v1271 = vpack.c.b16 %v1119, %v1115
        %v1272 = vpack.c.b16 %v1124, %v1120
        %v1273 = vpack.c.b16 %v1125, %v1121
        %v1274 = vpack.c.b16 %v1126, %v1122
        %v1275 = vpack.c.b16 %v1127, %v1123
        %v1276 = vpack.c.b16 %v1132, %v1128
        %v1277 = vpack.c.b16 %v1133, %v1129
        %v1278 = vpack.c.b16 %v1134, %v1130
        %v1279 = vpack.c.b16 %v1135, %v1131
        %v1280 = vpack.c.b16 %v1140, %v1136
        %v1281 = vpack.c.b16 %v1141, %v1137
        %v1282 = vpack.c.b16 %v1142, %v1138
        %v1283 = vpack.c.b16 %v1143, %v1139
        %v1284 = vpack.c.b16 %v1148, %v1144
        %v1285 = vpack.c.b16 %v1149, %v1145
        %v1286 = vpack.c.b16 %v1150, %v1146
        %v1287 = vpack.c.b16 %v1151, %v1147
        %v1288 = vpack.c.b16 %v1156, %v1152
        %v1289 = vpack.c.b16 %v1157, %v1153
        %v1290 = vpack.c.b16 %v1158, %v1154
        %v1291 = vpack.c.b16 %v1159, %v1155
        %v1292 = vpack.c.b16 %v1164, %v1160
        %v1293 = vpack.c.b16 %v1165, %v1161
        %v1294 = vpack.c.b16 %v1166, %v1162
        %v1295 = vpack.c.b16 %v1167, %v1163
        %1424 = vmatprep.subr.bf16.mxu0 %v1169
        %1425 = vmatpush1.bf16.msra.mxu0 %v1168
        %1426 = vmatprep.subr.bf16.mxu0 %v1173
        %1427 = vmatpush1.bf16.msra.mxu0 %v1172
        %1428 = vmatprep.subr.bf16.mxu0 %v1177
        %1429 = vmatpush1.bf16.msra.mxu0 %v1176
        %1430 = vmatprep.subr.bf16.mxu0 %v1181
        %1431 = vmatpush1.bf16.msra.mxu0 %v1180
        %1432 = vmatprep.subr.bf16.mxu0 %v1185
        %1433 = vmatpush1.bf16.msra.mxu0 %v1184
        %1434 = vmatprep.subr.bf16.mxu0 %v1189
        %1435 = vmatpush1.bf16.msra.mxu0 %v1188
        %1436 = vmatprep.subr.bf16.mxu0 %v1193
        %1437 = vmatpush1.bf16.msra.mxu0 %v1192
        %1438 = vmatprep.subr.bf16.mxu0 %v1197
        %1439 = vmatpush1.bf16.msra.mxu0 %v1196
        %1440 = vmatprep.subr.bf16.mxu0 %v1201
        %1441 = vmatpush1.bf16.msra.mxu0 %v1200
        %1442 = vmatprep.subr.bf16.mxu0 %v1205
        %1443 = vmatpush1.bf16.msra.mxu0 %v1204
        %1444 = vmatprep.subr.bf16.mxu0 %v1209
        %1445 = vmatpush1.bf16.msra.mxu0 %v1208
        %1446 = vmatprep.subr.bf16.mxu0 %v1213
        %1447 = vmatpush1.bf16.msra.mxu0 %v1212
        %1448 = vmatprep.subr.bf16.mxu0 %v1217
        %1449 = vmatpush1.bf16.msra.mxu0 %v1216
        %1450 = vmatprep.subr.bf16.mxu0 %v1221
        %1451 = vmatpush1.bf16.msra.mxu0 %v1220
        %1452 = vmatprep.subr.bf16.mxu0 %v1225
        %1453 = vmatpush1.bf16.msra.mxu0 %v1224
        %1454 = vmatprep.subr.bf16.mxu0 %v1229
        %1455 = vmatpush1.bf16.msra.mxu0 %v1228
        %1456 = vmatprep.mubr.bf16.mxu0 %v657
        %1457 = vmatmul.mubr.bf16.gmra.mrb[0].mxu0 %v656
        %v1458 = vpop.f32.mrb[0].mxu0
        %v1459 = vadd.f32 %v447, %v1458
        %v1460 = vpop.f32.mrb[0].mxu0
        %v1461 = vadd.f32 %v451, %v1460
        %v1462 = vpop.f32.mrb[0].mxu0
        %v1463 = vadd.f32 %v447, %v1462
        %v1464 = vpop.f32.mrb[0].mxu0
        %v1465 = vadd.f32 %v451, %v1464
        %1466 = vmatprep.mubr.bf16.mxu0 %v661
        %1467 = vmatmul.mubr.bf16.gmra.mrb[0].mxu0 %v660
        %v1468 = vpop.f32.mrb[0].mxu0
        %v1469 = vadd.f32 %v447, %v1468
        %v1470 = vpop.f32.mrb[0].mxu0
        %v1471 = vadd.f32 %v451, %v1470
        %v1472 = vpop.f32.mrb[0].mxu0
        %v1473 = vadd.f32 %v447, %v1472
        %v1474 = vpop.f32.mrb[0].mxu0
        %v1475 = vadd.f32 %v451, %v1474
        %1476 = vmatprep.mubr.bf16.mxu0 %v665
        %1477 = vmatmul.mubr.bf16.gmra.mrb[0].mxu0 %v664
        %v1478 = vpop.f32.mrb[0].mxu0
        %v1479 = vadd.f32 %v447, %v1478
        %v1480 = vpop.f32.mrb[0].mxu0
        %v1481 = vadd.f32 %v451, %v1480
        %v1482 = vpop.f32.mrb[0].mxu0
        %v1483 = vadd.f32 %v447, %v1482
        %v1484 = vpop.f32.mrb[0].mxu0
        %v1485 = vadd.f32 %v451, %v1484
        %1486 = vmatprep.mubr.bf16.mxu0 %v669
        %1487 = vmatmul.mubr.bf16.gmra.mrb[0].mxu0 %v668
        %v1488 = vpop.f32.mrb[0].mxu0
        %v1489 = vadd.f32 %v447, %v1488
        %v1490 = vpop.f32.mrb[0].mxu0
        %v1491 = vadd.f32 %v451, %v1490
        %v1492 = vpop.f32.mrb[0].mxu0
        %v1493 = vadd.f32 %v447, %v1492
        %v1494 = vpop.f32.mrb[0].mxu0
        %v1495 = vadd.f32 %v451, %v1494
        %1496 = vmatprep.mubr.bf16.mxu0 %v673
        %1497 = vmatmul.mubr.bf16.gmra.mrb[0].mxu0 %v672
        %v1498 = vpop.f32.mrb[0].mxu0
        %v1499 = vadd.f32 %v447, %v1498
        %v1500 = vpop.f32.mrb[0].mxu0
        %v1501 = vadd.f32 %v451, %v1500
        %v1502 = vpop.f32.mrb[0].mxu0
        %v1503 = vadd.f32 %v447, %v1502
        %v1504 = vpop.f32.mrb[0].mxu0
        %v1505 = vadd.f32 %v451, %v1504
        %1506 = vmatprep.mubr.bf16.mxu0 %v677
        %1507 = vmatmul.mubr.bf16.gmra.mrb[0].mxu0 %v676
        %v1508 = vpop.f32.mrb[0].mxu0
        %v1509 = vadd.f32 %v447, %v1508
        %v1510 = vpop.f32.mrb[0].mxu0
        %v1511 = vadd.f32 %v451, %v1510
        %v1512 = vpop.f32.mrb[0].mxu0
        %v1513 = vadd.f32 %v447, %v1512
        %v1514 = vpop.f32.mrb[0].mxu0
        %v1515 = vadd.f32 %v451, %v1514
        %1516 = vmatprep.mubr.bf16.mxu0 %v681
        %1517 = vmatmul.mubr.bf16.gmra.mrb[0].mxu0 %v680
        %v1518 = vpop.f32.mrb[0].mxu0
        %v1519 = vadd.f32 %v447, %v1518
        %v1520 = vpop.f32.mrb[0].mxu0
        %v1521 = vadd.f32 %v451, %v1520
        %v1522 = vpop.f32.mrb[0].mxu0
        %v1523 = vadd.f32 %v447, %v1522
        %v1524 = vpop.f32.mrb[0].mxu0
        %v1525 = vadd.f32 %v451, %v1524
        %1526 = vmatprep.mubr.bf16.mxu0 %v685
        %1527 = vmatmul.mubr.bf16.gmra.mrb[0].mxu0 %v684
        %v1528 = vpop.f32.mrb[0].mxu0
        %v1529 = vadd.f32 %v447, %v1528
        %v1530 = vpop.f32.mrb[0].mxu0
        %v1531 = vadd.f32 %v451, %v1530
        %v1532 = vpop.f32.mrb[0].mxu0
        %v1533 = vadd.f32 %v447, %v1532
        %v1534 = vpop.f32.mrb[0].mxu0
        %v1535 = vadd.f32 %v451, %v1534
        %1536 = vmatprep.mubr.bf16.mxu0 %v689
        %1537 = vmatmul.mubr.bf16.gmra.mrb[0].mxu0 %v688
        %v1538 = vpop.f32.mrb[0].mxu0
        %v1539 = vadd.f32 %v447, %v1538
        %v1540 = vpop.f32.mrb[0].mxu0
        %v1541 = vadd.f32 %v451, %v1540
        %v1542 = vpop.f32.mrb[0].mxu0
        %v1543 = vadd.f32 %v447, %v1542
        %v1544 = vpop.f32.mrb[0].mxu0
        %v1545 = vadd.f32 %v451, %v1544
        %1546 = vmatprep.mubr.bf16.mxu0 %v693
        %1547 = vmatmul.mubr.bf16.gmra.mrb[0].mxu0 %v692
        %v1548 = vpop.f32.mrb[0].mxu0
        %v1549 = vadd.f32 %v447, %v1548
        %v1550 = vpop.f32.mrb[0].mxu0
        %v1551 = vadd.f32 %v451, %v1550
        %v1552 = vpop.f32.mrb[0].mxu0
        %v1553 = vadd.f32 %v447, %v1552
        %v1554 = vpop.f32.mrb[0].mxu0
        %v1555 = vadd.f32 %v451, %v1554
        %1556 = vmatprep.mubr.bf16.mxu0 %v697
        %1557 = vmatmul.mubr.bf16.gmra.mrb[0].mxu0 %v696
        %v1558 = vpop.f32.mrb[0].mxu0
        %v1559 = vadd.f32 %v447, %v1558
        %v1560 = vpop.f32.mrb[0].mxu0
        %v1561 = vadd.f32 %v451, %v1560
        %v1562 = vpop.f32.mrb[0].mxu0
        %v1563 = vadd.f32 %v447, %v1562
        %v1564 = vpop.f32.mrb[0].mxu0
        %v1565 = vadd.f32 %v451, %v1564
        %1566 = vmatprep.mubr.bf16.mxu0 %v701
        %1567 = vmatmul.mubr.bf16.gmra.mrb[0].mxu0 %v700
        %v1568 = vpop.f32.mrb[0].mxu0
        %v1569 = vadd.f32 %v447, %v1568
        %v1570 = vpop.f32.mrb[0].mxu0
        %v1571 = vadd.f32 %v451, %v1570
        %v1572 = vpop.f32.mrb[0].mxu0
        %v1573 = vadd.f32 %v447, %v1572
        %v1574 = vpop.f32.mrb[0].mxu0
        %v1575 = vadd.f32 %v451, %v1574
        %1576 = vmatprep.mubr.bf16.mxu0 %v705
        %1577 = vmatmul.mubr.bf16.gmra.mrb[0].mxu0 %v704
        %v1578 = vpop.f32.mrb[0].mxu0
        %v1579 = vadd.f32 %v447, %v1578
        %v1580 = vpop.f32.mrb[0].mxu0
        %v1581 = vadd.f32 %v451, %v1580
        %v1582 = vpop.f32.mrb[0].mxu0
        %v1583 = vadd.f32 %v447, %v1582
        %v1584 = vpop.f32.mrb[0].mxu0
        %v1585 = vadd.f32 %v451, %v1584
        %1586 = vmatprep.mubr.bf16.mxu0 %v709
        %1587 = vmatmul.mubr.bf16.gmra.mrb[0].mxu0 %v708
        %v1588 = vpop.f32.mrb[0].mxu0
        %v1589 = vadd.f32 %v447, %v1588
        %v1590 = vpop.f32.mrb[0].mxu0
        %v1591 = vadd.f32 %v451, %v1590
        %v1592 = vpop.f32.mrb[0].mxu0
        %v1593 = vadd.f32 %v447, %v1592
        %v1594 = vpop.f32.mrb[0].mxu0
        %v1595 = vadd.f32 %v451, %v1594
        %1596 = vmatprep.mubr.bf16.mxu0 %v713
        %1597 = vmatmul.mubr.bf16.gmra.mrb[0].mxu0 %v712
        %v1598 = vpop.f32.mrb[0].mxu0
        %v1599 = vadd.f32 %v447, %v1598
        %v1600 = vpop.f32.mrb[0].mxu0
        %v1601 = vadd.f32 %v451, %v1600
        %v1602 = vpop.f32.mrb[0].mxu0
        %v1603 = vadd.f32 %v447, %v1602
        %v1604 = vpop.f32.mrb[0].mxu0
        %v1605 = vadd.f32 %v451, %v1604
        %1606 = vmatprep.mubr.bf16.mxu0 %v717
        %1607 = vmatmul.mubr.bf16.gmra.mrb[0].mxu0 %v716
        %v1608 = vpop.f32.mrb[0].mxu0
        %v1609 = vadd.f32 %v447, %v1608
        %v1610 = vpop.f32.mrb[0].mxu0
        %v1611 = vadd.f32 %v451, %v1610
        %v1612 = vpop.f32.mrb[0].mxu0
        %v1613 = vadd.f32 %v447, %v1612
        %v1614 = vpop.f32.mrb[0].mxu0
        %v1615 = vadd.f32 %v451, %v1614
        %1616 = vdwg.mxu0
        %1617 = vmatprep.subr.bf16.mxu0 %v1233
        %1618 = vmatpush1.bf16.msra.mxu0 %v1232
        %1619 = vmatprep.subr.bf16.mxu0 %v1237
        %1620 = vmatpush1.bf16.msra.mxu0 %v1236
        %1621 = vmatprep.subr.bf16.mxu0 %v1241
        %1622 = vmatpush1.bf16.msra.mxu0 %v1240
        %1623 = vmatprep.subr.bf16.mxu0 %v1245
        %1624 = vmatpush1.bf16.msra.mxu0 %v1244
        %1625 = vmatprep.subr.bf16.mxu0 %v1249
        %1626 = vmatpush1.bf16.msra.mxu0 %v1248
        %1627 = vmatprep.subr.bf16.mxu0 %v1253
        %1628 = vmatpush1.bf16.msra.mxu0 %v1252
        %1629 = vmatprep.subr.bf16.mxu0 %v1257
        %1630 = vmatpush1.bf16.msra.mxu0 %v1256
        %1631 = vmatprep.subr.bf16.mxu0 %v1261
        %1632 = vmatpush1.bf16.msra.mxu0 %v1260
        %1633 = vmatprep.subr.bf16.mxu0 %v1265
        %1634 = vmatpush1.bf16.msra.mxu0 %v1264
        %1635 = vmatprep.subr.bf16.mxu0 %v1269
        %1636 = vmatpush1.bf16.msra.mxu0 %v1268
        %1637 = vmatprep.subr.bf16.mxu0 %v1273
        %1638 = vmatpush1.bf16.msra.mxu0 %v1272
        %1639 = vmatprep.subr.bf16.mxu0 %v1277
        %1640 = vmatpush1.bf16.msra.mxu0 %v1276
        %1641 = vmatprep.subr.bf16.mxu0 %v1281
        %1642 = vmatpush1.bf16.msra.mxu0 %v1280
        %1643 = vmatprep.subr.bf16.mxu0 %v1285
        %1644 = vmatpush1.bf16.msra.mxu0 %v1284
        %1645 = vmatprep.subr.bf16.mxu0 %v1289
        %1646 = vmatpush1.bf16.msra.mxu0 %v1288
        %1647 = vmatprep.subr.bf16.mxu0 %v1293
        %1648 = vmatpush1.bf16.msra.mxu0 %v1292
        %1649 = vmatprep.mubr.bf16.mxu0 %v659
        %1650 = vmatmul.mubr.bf16.gmra.mrb[0].mxu0 %v658
        %v1651 = vpop.f32.mrb[0].mxu0
        %v1652 = vadd.f32 %v1459, %v1651
        %v1653 = vpop.f32.mrb[0].mxu0
        %v1654 = vadd.f32 %v1461, %v1653
        %v1655 = vpop.f32.mrb[0].mxu0
        %v1656 = vadd.f32 %v1463, %v1655
        %v1657 = vpop.f32.mrb[0].mxu0
        %v1658 = vadd.f32 %v1465, %v1657
        %1659 = vmatprep.mubr.bf16.mxu0 %v663
        %1660 = vmatmul.mubr.bf16.gmra.mrb[0].mxu0 %v662
        %v1661 = vpop.f32.mrb[0].mxu0
        %v1662 = vadd.f32 %v1469, %v1661
        %v1663 = vpop.f32.mrb[0].mxu0
        %v1664 = vadd.f32 %v1471, %v1663
        %v1665 = vpop.f32.mrb[0].mxu0
        %v1666 = vadd.f32 %v1473, %v1665
        %v1667 = vpop.f32.mrb[0].mxu0
        %v1668 = vadd.f32 %v1475, %v1667
        %1669 = vmatprep.mubr.bf16.mxu0 %v667
        %1670 = vmatmul.mubr.bf16.gmra.mrb[0].mxu0 %v666
        %v1671 = vpop.f32.mrb[0].mxu0
        %v1672 = vadd.f32 %v1479, %v1671
        %v1673 = vpop.f32.mrb[0].mxu0
        %v1674 = vadd.f32 %v1481, %v1673
        %v1675 = vpop.f32.mrb[0].mxu0
        %v1676 = vadd.f32 %v1483, %v1675
        %v1677 = vpop.f32.mrb[0].mxu0
        %v1678 = vadd.f32 %v1485, %v1677
        %1679 = vmatprep.mubr.bf16.mxu0 %v671
        %1680 = vmatmul.mubr.bf16.gmra.mrb[0].mxu0 %v670
        %v1681 = vpop.f32.mrb[0].mxu0
        %v1682 = vadd.f32 %v1489, %v1681
        %v1683 = vpop.f32.mrb[0].mxu0
        %v1684 = vadd.f32 %v1491, %v1683
        %v1685 = vpop.f32.mrb[0].mxu0
        %v1686 = vadd.f32 %v1493, %v1685
        %v1687 = vpop.f32.mrb[0].mxu0
        %v1688 = vadd.f32 %v1495, %v1687
        %1689 = vmatprep.mubr.bf16.mxu0 %v675
        %1690 = vmatmul.mubr.bf16.gmra.mrb[0].mxu0 %v674
        %v1691 = vpop.f32.mrb[0].mxu0
        %v1692 = vadd.f32 %v1499, %v1691
        %v1693 = vpop.f32.mrb[0].mxu0
        %v1694 = vadd.f32 %v1501, %v1693
        %v1695 = vpop.f32.mrb[0].mxu0
        %v1696 = vadd.f32 %v1503, %v1695
        %v1697 = vpop.f32.mrb[0].mxu0
        %v1698 = vadd.f32 %v1505, %v1697
        %1699 = vmatprep.mubr.bf16.mxu0 %v679
        %1700 = vmatmul.mubr.bf16.gmra.mrb[0].mxu0 %v678
        %v1701 = vpop.f32.mrb[0].mxu0
        %v1702 = vadd.f32 %v1509, %v1701
        %v1703 = vpop.f32.mrb[0].mxu0
        %v1704 = vadd.f32 %v1511, %v1703
        %v1705 = vpop.f32.mrb[0].mxu0
        %v1706 = vadd.f32 %v1513, %v1705
        %v1707 = vpop.f32.mrb[0].mxu0
        %v1708 = vadd.f32 %v1515, %v1707
        %1709 = vmatprep.mubr.bf16.mxu0 %v683
        %1710 = vmatmul.mubr.bf16.gmra.mrb[0].mxu0 %v682
        %v1711 = vpop.f32.mrb[0].mxu0
        %v1712 = vadd.f32 %v1519, %v1711
        %v1713 = vpop.f32.mrb[0].mxu0
        %v1714 = vadd.f32 %v1521, %v1713
        %v1715 = vpop.f32.mrb[0].mxu0
        %v1716 = vadd.f32 %v1523, %v1715
        %v1717 = vpop.f32.mrb[0].mxu0
        %v1718 = vadd.f32 %v1525, %v1717
        %1719 = vmatprep.mubr.bf16.mxu0 %v687
        %1720 = vmatmul.mubr.bf16.gmra.mrb[0].mxu0 %v686
        %v1721 = vpop.f32.mrb[0].mxu0
        %v1722 = vadd.f32 %v1529, %v1721
        %v1723 = vpop.f32.mrb[0].mxu0
        %v1724 = vadd.f32 %v1531, %v1723
        %v1725 = vpop.f32.mrb[0].mxu0
        %v1726 = vadd.f32 %v1533, %v1725
        %v1727 = vpop.f32.mrb[0].mxu0
        %v1728 = vadd.f32 %v1535, %v1727
        %1729 = vmatprep.mubr.bf16.mxu0 %v691
        %1730 = vmatmul.mubr.bf16.gmra.mrb[0].mxu0 %v690
        %v1731 = vpop.f32.mrb[0].mxu0
        %v1732 = vadd.f32 %v1539, %v1731
        %v1733 = vpop.f32.mrb[0].mxu0
        %v1734 = vadd.f32 %v1541, %v1733
        %v1735 = vpop.f32.mrb[0].mxu0
        %v1736 = vadd.f32 %v1543, %v1735
        %v1737 = vpop.f32.mrb[0].mxu0
        %v1738 = vadd.f32 %v1545, %v1737
        %1739 = vmatprep.mubr.bf16.mxu0 %v695
        %1740 = vmatmul.mubr.bf16.gmra.mrb[0].mxu0 %v694
        %v1741 = vpop.f32.mrb[0].mxu0
        %v1742 = vadd.f32 %v1549, %v1741
        %v1743 = vpop.f32.mrb[0].mxu0
        %v1744 = vadd.f32 %v1551, %v1743
        %v1745 = vpop.f32.mrb[0].mxu0
        %v1746 = vadd.f32 %v1553, %v1745
        %v1747 = vpop.f32.mrb[0].mxu0
        %v1748 = vadd.f32 %v1555, %v1747
        %1749 = vmatprep.mubr.bf16.mxu0 %v699
        %1750 = vmatmul.mubr.bf16.gmra.mrb[0].mxu0 %v698
        %v1751 = vpop.f32.mrb[0].mxu0
        %v1752 = vadd.f32 %v1559, %v1751
        %v1753 = vpop.f32.mrb[0].mxu0
        %v1754 = vadd.f32 %v1561, %v1753
        %v1755 = vpop.f32.mrb[0].mxu0
        %v1756 = vadd.f32 %v1563, %v1755
        %v1757 = vpop.f32.mrb[0].mxu0
        %v1758 = vadd.f32 %v1565, %v1757
        %1759 = vmatprep.mubr.bf16.mxu0 %v703
        %1760 = vmatmul.mubr.bf16.gmra.mrb[0].mxu0 %v702
        %v1761 = vpop.f32.mrb[0].mxu0
        %v1762 = vadd.f32 %v1569, %v1761
        %v1763 = vpop.f32.mrb[0].mxu0
        %v1764 = vadd.f32 %v1571, %v1763
        %v1765 = vpop.f32.mrb[0].mxu0
        %v1766 = vadd.f32 %v1573, %v1765
        %v1767 = vpop.f32.mrb[0].mxu0
        %v1768 = vadd.f32 %v1575, %v1767
        %1769 = vmatprep.mubr.bf16.mxu0 %v707
        %1770 = vmatmul.mubr.bf16.gmra.mrb[0].mxu0 %v706
        %v1771 = vpop.f32.mrb[0].mxu0
        %v1772 = vadd.f32 %v1579, %v1771
        %v1773 = vpop.f32.mrb[0].mxu0
        %v1774 = vadd.f32 %v1581, %v1773
        %v1775 = vpop.f32.mrb[0].mxu0
        %v1776 = vadd.f32 %v1583, %v1775
        %v1777 = vpop.f32.mrb[0].mxu0
        %v1778 = vadd.f32 %v1585, %v1777
        %1779 = vmatprep.mubr.bf16.mxu0 %v711
        %1780 = vmatmul.mubr.bf16.gmra.mrb[0].mxu0 %v710
        %v1781 = vpop.f32.mrb[0].mxu0
        %v1782 = vadd.f32 %v1589, %v1781
        %v1783 = vpop.f32.mrb[0].mxu0
        %v1784 = vadd.f32 %v1591, %v1783
        %v1785 = vpop.f32.mrb[0].mxu0
        %v1786 = vadd.f32 %v1593, %v1785
        %v1787 = vpop.f32.mrb[0].mxu0
        %v1788 = vadd.f32 %v1595, %v1787
        %1789 = vmatprep.mubr.bf16.mxu0 %v715
        %1790 = vmatmul.mubr.bf16.gmra.mrb[0].mxu0 %v714
        %v1791 = vpop.f32.mrb[0].mxu0
        %v1792 = vadd.f32 %v1599, %v1791
        %v1793 = vpop.f32.mrb[0].mxu0
        %v1794 = vadd.f32 %v1601, %v1793
        %v1795 = vpop.f32.mrb[0].mxu0
        %v1796 = vadd.f32 %v1603, %v1795
        %v1797 = vpop.f32.mrb[0].mxu0
        %v1798 = vadd.f32 %v1605, %v1797
        %1799 = vmatprep.mubr.bf16.mxu0 %v719
        %1800 = vmatmul.mubr.bf16.gmra.mrb[0].mxu0 %v718
        %v1801 = vpop.f32.mrb[0].mxu0
        %v1802 = vadd.f32 %v1609, %v1801
        %v1803 = vpop.f32.mrb[0].mxu0
        %v1804 = vadd.f32 %v1611, %v1803
        %v1805 = vpop.f32.mrb[0].mxu0
        %v1806 = vadd.f32 %v1613, %v1805
        %v1807 = vpop.f32.mrb[0].mxu0
        %v1808 = vadd.f32 %v1615, %v1807
        %1809 = vdwg.mxu0
        %1810 = vmatprep.subr.bf16.mxu0 %v1171
        %1811 = vmatpush1.bf16.msra.mxu0 %v1170
        %1812 = vmatprep.subr.bf16.mxu0 %v1175
        %1813 = vmatpush1.bf16.msra.mxu0 %v1174
        %1814 = vmatprep.subr.bf16.mxu0 %v1179
        %1815 = vmatpush1.bf16.msra.mxu0 %v1178
        %1816 = vmatprep.subr.bf16.mxu0 %v1183
        %1817 = vmatpush1.bf16.msra.mxu0 %v1182
        %1818 = vmatprep.subr.bf16.mxu0 %v1187
        %1819 = vmatpush1.bf16.msra.mxu0 %v1186
        %1820 = vmatprep.subr.bf16.mxu0 %v1191
        %1821 = vmatpush1.bf16.msra.mxu0 %v1190
        %1822 = vmatprep.subr.bf16.mxu0 %v1195
        %1823 = vmatpush1.bf16.msra.mxu0 %v1194
        %1824 = vmatprep.subr.bf16.mxu0 %v1199
        %1825 = vmatpush1.bf16.msra.mxu0 %v1198
        %1826 = vmatprep.subr.bf16.mxu0 %v1203
        %1827 = vmatpush1.bf16.msra.mxu0 %v1202
        %1828 = vmatprep.subr.bf16.mxu0 %v1207
        %1829 = vmatpush1.bf16.msra.mxu0 %v1206
        %1830 = vmatprep.subr.bf16.mxu0 %v1211
        %1831 = vmatpush1.bf16.msra.mxu0 %v1210
        %1832 = vmatprep.subr.bf16.mxu0 %v1215
        %1833 = vmatpush1.bf16.msra.mxu0 %v1214
        %1834 = vmatprep.subr.bf16.mxu0 %v1219
        %1835 = vmatpush1.bf16.msra.mxu0 %v1218
        %1836 = vmatprep.subr.bf16.mxu0 %v1223
        %1837 = vmatpush1.bf16.msra.mxu0 %v1222
        %1838 = vmatprep.subr.bf16.mxu0 %v1227
        %1839 = vmatpush1.bf16.msra.mxu0 %v1226
        %1840 = vmatprep.subr.bf16.mxu0 %v1231
        %1841 = vmatpush1.bf16.msra.mxu0 %v1230
        %1842 = vmatprep.mubr.bf16.mxu0 %v657
        %1843 = vmatmul.mubr.bf16.gmra.mrb[0].mxu0 %v656
        %v1844 = vpop.f32.mrb[0].mxu0
        %v1845 = vadd.f32 %v455, %v1844
        %v1846 = vpop.f32.mrb[0].mxu0
        %v1847 = vadd.f32 %v459, %v1846
        %v1848 = vpop.f32.mrb[0].mxu0
        %v1849 = vadd.f32 %v455, %v1848
        %v1850 = vpop.f32.mrb[0].mxu0
        %v1851 = vadd.f32 %v459, %v1850
        %1852 = vmatprep.mubr.bf16.mxu0 %v661
        %1853 = vmatmul.mubr.bf16.gmra.mrb[0].mxu0 %v660
        %v1854 = vpop.f32.mrb[0].mxu0
        %v1855 = vadd.f32 %v455, %v1854
        %v1856 = vpop.f32.mrb[0].mxu0
        %v1857 = vadd.f32 %v459, %v1856
        %v1858 = vpop.f32.mrb[0].mxu0
        %v1859 = vadd.f32 %v455, %v1858
        %v1860 = vpop.f32.mrb[0].mxu0
        %v1861 = vadd.f32 %v459, %v1860
        %1862 = vmatprep.mubr.bf16.mxu0 %v665
        %1863 = vmatmul.mubr.bf16.gmra.mrb[0].mxu0 %v664
        %v1864 = vpop.f32.mrb[0].mxu0
        %v1865 = vadd.f32 %v455, %v1864
        %v1866 = vpop.f32.mrb[0].mxu0
        %v1867 = vadd.f32 %v459, %v1866
        %v1868 = vpop.f32.mrb[0].mxu0
        %v1869 = vadd.f32 %v455, %v1868
        %v1870 = vpop.f32.mrb[0].mxu0
        %v1871 = vadd.f32 %v459, %v1870
        %1872 = vmatprep.mubr.bf16.mxu0 %v669
        %1873 = vmatmul.mubr.bf16.gmra.mrb[0].mxu0 %v668
        %v1874 = vpop.f32.mrb[0].mxu0
        %v1875 = vadd.f32 %v455, %v1874
        %v1876 = vpop.f32.mrb[0].mxu0
        %v1877 = vadd.f32 %v459, %v1876
        %v1878 = vpop.f32.mrb[0].mxu0
        %v1879 = vadd.f32 %v455, %v1878
        %v1880 = vpop.f32.mrb[0].mxu0
        %v1881 = vadd.f32 %v459, %v1880
        %1882 = vmatprep.mubr.bf16.mxu0 %v673
        %1883 = vmatmul.mubr.bf16.gmra.mrb[0].mxu0 %v672
        %v1884 = vpop.f32.mrb[0].mxu0
        %v1885 = vadd.f32 %v455, %v1884
        %v1886 = vpop.f32.mrb[0].mxu0
        %v1887 = vadd.f32 %v459, %v1886
        %v1888 = vpop.f32.mrb[0].mxu0
        %v1889 = vadd.f32 %v455, %v1888
        %v1890 = vpop.f32.mrb[0].mxu0
        %v1891 = vadd.f32 %v459, %v1890
        %1892 = vmatprep.mubr.bf16.mxu0 %v677
        %1893 = vmatmul.mubr.bf16.gmra.mrb[0].mxu0 %v676
        %v1894 = vpop.f32.mrb[0].mxu0
        %v1895 = vadd.f32 %v455, %v1894
        %v1896 = vpop.f32.mrb[0].mxu0
        %v1897 = vadd.f32 %v459, %v1896
        %v1898 = vpop.f32.mrb[0].mxu0
        %v1899 = vadd.f32 %v455, %v1898
        %v1900 = vpop.f32.mrb[0].mxu0
        %v1901 = vadd.f32 %v459, %v1900
        %1902 = vmatprep.mubr.bf16.mxu0 %v681
        %1903 = vmatmul.mubr.bf16.gmra.mrb[0].mxu0 %v680
        %v1904 = vpop.f32.mrb[0].mxu0
        %v1905 = vadd.f32 %v455, %v1904
        %v1906 = vpop.f32.mrb[0].mxu0
        %v1907 = vadd.f32 %v459, %v1906
        %v1908 = vpop.f32.mrb[0].mxu0
        %v1909 = vadd.f32 %v455, %v1908
        %v1910 = vpop.f32.mrb[0].mxu0
        %v1911 = vadd.f32 %v459, %v1910
        %1912 = vmatprep.mubr.bf16.mxu0 %v685
        %1913 = vmatmul.mubr.bf16.gmra.mrb[0].mxu0 %v684
        %v1914 = vpop.f32.mrb[0].mxu0
        %v1915 = vadd.f32 %v455, %v1914
        %v1916 = vpop.f32.mrb[0].mxu0
        %v1917 = vadd.f32 %v459, %v1916
        %v1918 = vpop.f32.mrb[0].mxu0
        %v1919 = vadd.f32 %v455, %v1918
        %v1920 = vpop.f32.mrb[0].mxu0
        %v1921 = vadd.f32 %v459, %v1920
        %1922 = vmatprep.mubr.bf16.mxu0 %v689
        %1923 = vmatmul.mubr.bf16.gmra.mrb[0].mxu0 %v688
        %v1924 = vpop.f32.mrb[0].mxu0
        %v1925 = vadd.f32 %v455, %v1924
        %v1926 = vpop.f32.mrb[0].mxu0
        %v1927 = vadd.f32 %v459, %v1926
        %v1928 = vpop.f32.mrb[0].mxu0
        %v1929 = vadd.f32 %v455, %v1928
        %v1930 = vpop.f32.mrb[0].mxu0
        %v1931 = vadd.f32 %v459, %v1930
        %1932 = vmatprep.mubr.bf16.mxu0 %v693
        %1933 = vmatmul.mubr.bf16.gmra.mrb[0].mxu0 %v692
        %v1934 = vpop.f32.mrb[0].mxu0
        %v1935 = vadd.f32 %v455, %v1934
        %v1936 = vpop.f32.mrb[0].mxu0
        %v1937 = vadd.f32 %v459, %v1936
        %v1938 = vpop.f32.mrb[0].mxu0
        %v1939 = vadd.f32 %v455, %v1938
        %v1940 = vpop.f32.mrb[0].mxu0
        %v1941 = vadd.f32 %v459, %v1940
        %1942 = vmatprep.mubr.bf16.mxu0 %v697
        %1943 = vmatmul.mubr.bf16.gmra.mrb[0].mxu0 %v696
        %v1944 = vpop.f32.mrb[0].mxu0
        %v1945 = vadd.f32 %v455, %v1944
        %v1946 = vpop.f32.mrb[0].mxu0
        %v1947 = vadd.f32 %v459, %v1946
        %v1948 = vpop.f32.mrb[0].mxu0
        %v1949 = vadd.f32 %v455, %v1948
        %v1950 = vpop.f32.mrb[0].mxu0
        %v1951 = vadd.f32 %v459, %v1950
        %1952 = vmatprep.mubr.bf16.mxu0 %v701
        %1953 = vmatmul.mubr.bf16.gmra.mrb[0].mxu0 %v700
        %v1954 = vpop.f32.mrb[0].mxu0
        %v1955 = vadd.f32 %v455, %v1954
        %v1956 = vpop.f32.mrb[0].mxu0
        %v1957 = vadd.f32 %v459, %v1956
        %v1958 = vpop.f32.mrb[0].mxu0
        %v1959 = vadd.f32 %v455, %v1958
        %v1960 = vpop.f32.mrb[0].mxu0
        %v1961 = vadd.f32 %v459, %v1960
        %1962 = vmatprep.mubr.bf16.mxu0 %v705
        %1963 = vmatmul.mubr.bf16.gmra.mrb[0].mxu0 %v704
        %v1964 = vpop.f32.mrb[0].mxu0
        %v1965 = vadd.f32 %v455, %v1964
        %v1966 = vpop.f32.mrb[0].mxu0
        %v1967 = vadd.f32 %v459, %v1966
        %v1968 = vpop.f32.mrb[0].mxu0
        %v1969 = vadd.f32 %v455, %v1968
        %v1970 = vpop.f32.mrb[0].mxu0
        %v1971 = vadd.f32 %v459, %v1970
        %1972 = vmatprep.mubr.bf16.mxu0 %v709
        %1973 = vmatmul.mubr.bf16.gmra.mrb[0].mxu0 %v708
        %v1974 = vpop.f32.mrb[0].mxu0
        %v1975 = vadd.f32 %v455, %v1974
        %v1976 = vpop.f32.mrb[0].mxu0
        %v1977 = vadd.f32 %v459, %v1976
        %v1978 = vpop.f32.mrb[0].mxu0
        %v1979 = vadd.f32 %v455, %v1978
        %v1980 = vpop.f32.mrb[0].mxu0
        %v1981 = vadd.f32 %v459, %v1980
        %1982 = vmatprep.mubr.bf16.mxu0 %v713
        %1983 = vmatmul.mubr.bf16.gmra.mrb[0].mxu0 %v712
        %v1984 = vpop.f32.mrb[0].mxu0
        %v1985 = vadd.f32 %v455, %v1984
        %v1986 = vpop.f32.mrb[0].mxu0
        %v1987 = vadd.f32 %v459, %v1986
        %v1988 = vpop.f32.mrb[0].mxu0
        %v1989 = vadd.f32 %v455, %v1988
        %v1990 = vpop.f32.mrb[0].mxu0
        %v1991 = vadd.f32 %v459, %v1990
        %1992 = vmatprep.mubr.bf16.mxu0 %v717
        %1993 = vmatmul.mubr.bf16.gmra.mrb[0].mxu0 %v716
        %v1994 = vpop.f32.mrb[0].mxu0
        %v1995 = vadd.f32 %v455, %v1994
        %v1996 = vpop.f32.mrb[0].mxu0
        %v1997 = vadd.f32 %v459, %v1996
        %v1998 = vpop.f32.mrb[0].mxu0
        %v1999 = vadd.f32 %v455, %v1998
        %v2000 = vpop.f32.mrb[0].mxu0
        %v2001 = vadd.f32 %v459, %v2000
        %2002 = vdwg.mxu0
        %2003 = vmatprep.subr.bf16.mxu0 %v1235
        %2004 = vmatpush1.bf16.msra.mxu0 %v1234
        %2005 = vmatprep.subr.bf16.mxu0 %v1239
        %2006 = vmatpush1.bf16.msra.mxu0 %v1238
        %2007 = vmatprep.subr.bf16.mxu0 %v1243
        %2008 = vmatpush1.bf16.msra.mxu0 %v1242
        %2009 = vmatprep.subr.bf16.mxu0 %v1247
        %2010 = vmatpush1.bf16.msra.mxu0 %v1246
        %2011 = vmatprep.subr.bf16.mxu0 %v1251
        %2012 = vmatpush1.bf16.msra.mxu0 %v1250
        %2013 = vmatprep.subr.bf16.mxu0 %v1255
        %2014 = vmatpush1.bf16.msra.mxu0 %v1254
        %2015 = vmatprep.subr.bf16.mxu0 %v1259
        %2016 = vmatpush1.bf16.msra.mxu0 %v1258
        %2017 = vmatprep.subr.bf16.mxu0 %v1263
        %2018 = vmatpush1.bf16.msra.mxu0 %v1262
        %2019 = vmatprep.subr.bf16.mxu0 %v1267
        %2020 = vmatpush1.bf16.msra.mxu0 %v1266
        %2021 = vmatprep.subr.bf16.mxu0 %v1271
        %2022 = vmatpush1.bf16.msra.mxu0 %v1270
        %2023 = vmatprep.subr.bf16.mxu0 %v1275
        %2024 = vmatpush1.bf16.msra.mxu0 %v1274
        %2025 = vmatprep.subr.bf16.mxu0 %v1279
        %2026 = vmatpush1.bf16.msra.mxu0 %v1278
        %2027 = vmatprep.subr.bf16.mxu0 %v1283
        %2028 = vmatpush1.bf16.msra.mxu0 %v1282
        %2029 = vmatprep.subr.bf16.mxu0 %v1287
        %2030 = vmatpush1.bf16.msra.mxu0 %v1286
        %2031 = vmatprep.subr.bf16.mxu0 %v1291
        %2032 = vmatpush1.bf16.msra.mxu0 %v1290
        %2033 = vmatprep.subr.bf16.mxu0 %v1295
        %2034 = vmatpush1.bf16.msra.mxu0 %v1294
        %2035 = vmatprep.mubr.bf16.mxu0 %v659
        %2036 = vmatmul.mubr.bf16.gmra.mrb[0].mxu0 %v658
        %v2037 = vpop.f32.mrb[0].mxu0
        %v2038 = vadd.f32 %v1845, %v2037
        %v2039 = vpop.f32.mrb[0].mxu0
        %v2040 = vadd.f32 %v1847, %v2039
        %v2041 = vpop.f32.mrb[0].mxu0
        %v2042 = vadd.f32 %v1849, %v2041
        %v2043 = vpop.f32.mrb[0].mxu0
        %v2044 = vadd.f32 %v1851, %v2043
        %2045 = vmatprep.mubr.bf16.mxu0 %v663
        %2046 = vmatmul.mubr.bf16.gmra.mrb[0].mxu0 %v662
        %v2047 = vpop.f32.mrb[0].mxu0
        %v2048 = vadd.f32 %v1855, %v2047
        %v2049 = vpop.f32.mrb[0].mxu0
        %v2050 = vadd.f32 %v1857, %v2049
        %v2051 = vpop.f32.mrb[0].mxu0
        %v2052 = vadd.f32 %v1859, %v2051
        %v2053 = vpop.f32.mrb[0].mxu0
        %v2054 = vadd.f32 %v1861, %v2053
        %2055 = vmatprep.mubr.bf16.mxu0 %v667
        %2056 = vmatmul.mubr.bf16.gmra.mrb[0].mxu0 %v666
        %v2057 = vpop.f32.mrb[0].mxu0
        %v2058 = vadd.f32 %v1865, %v2057
        %v2059 = vpop.f32.mrb[0].mxu0
        %v2060 = vadd.f32 %v1867, %v2059
        %v2061 = vpop.f32.mrb[0].mxu0
        %v2062 = vadd.f32 %v1869, %v2061
        %v2063 = vpop.f32.mrb[0].mxu0
        %v2064 = vadd.f32 %v1871, %v2063
        %2065 = vmatprep.mubr.bf16.mxu0 %v671
        %2066 = vmatmul.mubr.bf16.gmra.mrb[0].mxu0 %v670
        %v2067 = vpop.f32.mrb[0].mxu0
        %v2068 = vadd.f32 %v1875, %v2067
        %v2069 = vpop.f32.mrb[0].mxu0
        %v2070 = vadd.f32 %v1877, %v2069
        %v2071 = vpop.f32.mrb[0].mxu0
        %v2072 = vadd.f32 %v1879, %v2071
        %v2073 = vpop.f32.mrb[0].mxu0
        %v2074 = vadd.f32 %v1881, %v2073
        %2075 = vmatprep.mubr.bf16.mxu0 %v675
        %2076 = vmatmul.mubr.bf16.gmra.mrb[0].mxu0 %v674
        %v2077 = vpop.f32.mrb[0].mxu0
        %v2078 = vadd.f32 %v1885, %v2077
        %v2079 = vpop.f32.mrb[0].mxu0
        %v2080 = vadd.f32 %v1887, %v2079
        %v2081 = vpop.f32.mrb[0].mxu0
        %v2082 = vadd.f32 %v1889, %v2081
        %v2083 = vpop.f32.mrb[0].mxu0
        %v2084 = vadd.f32 %v1891, %v2083
        %2085 = vmatprep.mubr.bf16.mxu0 %v679
        %2086 = vmatmul.mubr.bf16.gmra.mrb[0].mxu0 %v678
        %v2087 = vpop.f32.mrb[0].mxu0
        %v2088 = vadd.f32 %v1895, %v2087
        %v2089 = vpop.f32.mrb[0].mxu0
        %v2090 = vadd.f32 %v1897, %v2089
        %v2091 = vpop.f32.mrb[0].mxu0
        %v2092 = vadd.f32 %v1899, %v2091
        %v2093 = vpop.f32.mrb[0].mxu0
        %v2094 = vadd.f32 %v1901, %v2093
        %2095 = vmatprep.mubr.bf16.mxu0 %v683
        %2096 = vmatmul.mubr.bf16.gmra.mrb[0].mxu0 %v682
        %v2097 = vpop.f32.mrb[0].mxu0
        %v2098 = vadd.f32 %v1905, %v2097
        %v2099 = vpop.f32.mrb[0].mxu0
        %v2100 = vadd.f32 %v1907, %v2099
        %v2101 = vpop.f32.mrb[0].mxu0
        %v2102 = vadd.f32 %v1909, %v2101
        %v2103 = vpop.f32.mrb[0].mxu0
        %v2104 = vadd.f32 %v1911, %v2103
        %2105 = vmatprep.mubr.bf16.mxu0 %v687
        %2106 = vmatmul.mubr.bf16.gmra.mrb[0].mxu0 %v686
        %v2107 = vpop.f32.mrb[0].mxu0
        %v2108 = vadd.f32 %v1915, %v2107
        %v2109 = vpop.f32.mrb[0].mxu0
        %v2110 = vadd.f32 %v1917, %v2109
        %v2111 = vpop.f32.mrb[0].mxu0
        %v2112 = vadd.f32 %v1919, %v2111
        %v2113 = vpop.f32.mrb[0].mxu0
        %v2114 = vadd.f32 %v1921, %v2113
        %2115 = vmatprep.mubr.bf16.mxu0 %v691
        %2116 = vmatmul.mubr.bf16.gmra.mrb[0].mxu0 %v690
        %v2117 = vpop.f32.mrb[0].mxu0
        %v2118 = vadd.f32 %v1925, %v2117
        %v2119 = vpop.f32.mrb[0].mxu0
        %v2120 = vadd.f32 %v1927, %v2119
        %v2121 = vpop.f32.mrb[0].mxu0
        %v2122 = vadd.f32 %v1929, %v2121
        %v2123 = vpop.f32.mrb[0].mxu0
        %v2124 = vadd.f32 %v1931, %v2123
        %2125 = vmatprep.mubr.bf16.mxu0 %v695
        %2126 = vmatmul.mubr.bf16.gmra.mrb[0].mxu0 %v694
        %v2127 = vpop.f32.mrb[0].mxu0
        %v2128 = vadd.f32 %v1935, %v2127
        %v2129 = vpop.f32.mrb[0].mxu0
        %v2130 = vadd.f32 %v1937, %v2129
        %v2131 = vpop.f32.mrb[0].mxu0
        %v2132 = vadd.f32 %v1939, %v2131
        %v2133 = vpop.f32.mrb[0].mxu0
        %v2134 = vadd.f32 %v1941, %v2133
        %2135 = vmatprep.mubr.bf16.mxu0 %v699
        %2136 = vmatmul.mubr.bf16.gmra.mrb[0].mxu0 %v698
        %v2137 = vpop.f32.mrb[0].mxu0
        %v2138 = vadd.f32 %v1945, %v2137
        %v2139 = vpop.f32.mrb[0].mxu0
        %v2140 = vadd.f32 %v1947, %v2139
        %v2141 = vpop.f32.mrb[0].mxu0
        %v2142 = vadd.f32 %v1949, %v2141
        %v2143 = vpop.f32.mrb[0].mxu0
        %v2144 = vadd.f32 %v1951, %v2143
        %2145 = vmatprep.mubr.bf16.mxu0 %v703
        %2146 = vmatmul.mubr.bf16.gmra.mrb[0].mxu0 %v702
        %v2147 = vpop.f32.mrb[0].mxu0
        %v2148 = vadd.f32 %v1955, %v2147
        %v2149 = vpop.f32.mrb[0].mxu0
        %v2150 = vadd.f32 %v1957, %v2149
        %v2151 = vpop.f32.mrb[0].mxu0
        %v2152 = vadd.f32 %v1959, %v2151
        %v2153 = vpop.f32.mrb[0].mxu0
        %v2154 = vadd.f32 %v1961, %v2153
        %2155 = vmatprep.mubr.bf16.mxu0 %v707
        %2156 = vmatmul.mubr.bf16.gmra.mrb[0].mxu0 %v706
        %v2157 = vpop.f32.mrb[0].mxu0
        %v2158 = vadd.f32 %v1965, %v2157
        %v2159 = vpop.f32.mrb[0].mxu0
        %v2160 = vadd.f32 %v1967, %v2159
        %v2161 = vpop.f32.mrb[0].mxu0
        %v2162 = vadd.f32 %v1969, %v2161
        %v2163 = vpop.f32.mrb[0].mxu0
        %v2164 = vadd.f32 %v1971, %v2163
        %2165 = vmatprep.mubr.bf16.mxu0 %v711
        %2166 = vmatmul.mubr.bf16.gmra.mrb[0].mxu0 %v710
        %v2167 = vpop.f32.mrb[0].mxu0
        %v2168 = vadd.f32 %v1975, %v2167
        %v2169 = vpop.f32.mrb[0].mxu0
        %v2170 = vadd.f32 %v1977, %v2169
        %v2171 = vpop.f32.mrb[0].mxu0
        %v2172 = vadd.f32 %v1979, %v2171
        %v2173 = vpop.f32.mrb[0].mxu0
        %v2174 = vadd.f32 %v1981, %v2173
        %2175 = vmatprep.mubr.bf16.mxu0 %v715
        %2176 = vmatmul.mubr.bf16.gmra.mrb[0].mxu0 %v714
        %v2177 = vpop.f32.mrb[0].mxu0
        %v2178 = vadd.f32 %v1985, %v2177
        %v2179 = vpop.f32.mrb[0].mxu0
        %v2180 = vadd.f32 %v1987, %v2179
        %v2181 = vpop.f32.mrb[0].mxu0
        %v2182 = vadd.f32 %v1989, %v2181
        %v2183 = vpop.f32.mrb[0].mxu0
        %v2184 = vadd.f32 %v1991, %v2183
        %2185 = vmatprep.mubr.bf16.mxu0 %v719
        %2186 = vmatmul.mubr.bf16.gmra.mrb[0].mxu0 %v718
        %v2187 = vpop.f32.mrb[0].mxu0
        %v2188 = vadd.f32 %v1995, %v2187
        %v2189 = vpop.f32.mrb[0].mxu0
        %v2190 = vadd.f32 %v1997, %v2189
        %v2191 = vpop.f32.mrb[0].mxu0
        %v2192 = vadd.f32 %v1999, %v2191
        %v2193 = vpop.f32.mrb[0].mxu0
        %v2194 = vadd.f32 %v2001, %v2193
        %2195 = vdwg.mxu0
        %v2196 = vmul.f32 %v1652, 0.5
        %v2197 = vmul.f32 %v1654, 0.5
        %v2198 = vmul.f32 %v2038, 0.5
        %v2199 = vmul.f32 %v2040, 0.5
        %v2200 = vmul.f32 %v1656, 0.5
        %v2201 = vmul.f32 %v1658, 0.5
        %v2202 = vmul.f32 %v2042, 0.5
        %v2203 = vmul.f32 %v2044, 0.5
        %v2204 = vmul.f32 %v1662, 0.5
        %v2205 = vmul.f32 %v1664, 0.5
        %v2206 = vmul.f32 %v2048, 0.5
        %v2207 = vmul.f32 %v2050, 0.5
        %v2208 = vmul.f32 %v1666, 0.5
        %v2209 = vmul.f32 %v1668, 0.5
        %v2210 = vmul.f32 %v2052, 0.5
        %v2211 = vmul.f32 %v2054, 0.5
        %v2212 = vmul.f32 %v1672, 0.5
        %v2213 = vmul.f32 %v1674, 0.5
        %v2214 = vmul.f32 %v2058, 0.5
        %v2215 = vmul.f32 %v2060, 0.5
        %v2216 = vmul.f32 %v1676, 0.5
        %v2217 = vmul.f32 %v1678, 0.5
        %v2218 = vmul.f32 %v2062, 0.5
        %v2219 = vmul.f32 %v2064, 0.5
        %v2220 = vmul.f32 %v1682, 0.5
        %v2221 = vmul.f32 %v1684, 0.5
        %v2222 = vmul.f32 %v2068, 0.5
        %v2223 = vmul.f32 %v2070, 0.5
        %v2224 = vmul.f32 %v1686, 0.5
        %v2225 = vmul.f32 %v1688, 0.5
        %v2226 = vmul.f32 %v2072, 0.5
        %v2227 = vmul.f32 %v2074, 0.5
        %v2228 = vmul.f32 %v1692, 0.5
        %v2229 = vmul.f32 %v1694, 0.5
        %v2230 = vmul.f32 %v2078, 0.5
        %v2231 = vmul.f32 %v2080, 0.5
        %v2232 = vmul.f32 %v1696, 0.5
        %v2233 = vmul.f32 %v1698, 0.5
        %v2234 = vmul.f32 %v2082, 0.5
        %v2235 = vmul.f32 %v2084, 0.5
        %v2236 = vmul.f32 %v1702, 0.5
        %v2237 = vmul.f32 %v1704, 0.5
        %v2238 = vmul.f32 %v2088, 0.5
        %v2239 = vmul.f32 %v2090, 0.5
        %v2240 = vmul.f32 %v1706, 0.5
        %v2241 = vmul.f32 %v1708, 0.5
        %v2242 = vmul.f32 %v2092, 0.5
        %v2243 = vmul.f32 %v2094, 0.5
        %v2244 = vmul.f32 %v1712, 0.5
        %v2245 = vmul.f32 %v1714, 0.5
        %v2246 = vmul.f32 %v2098, 0.5
        %v2247 = vmul.f32 %v2100, 0.5
        %v2248 = vmul.f32 %v1716, 0.5
        %v2249 = vmul.f32 %v1718, 0.5
        %v2250 = vmul.f32 %v2102, 0.5
        %v2251 = vmul.f32 %v2104, 0.5
        %v2252 = vmul.f32 %v1722, 0.5
        %v2253 = vmul.f32 %v1724, 0.5
        %v2254 = vmul.f32 %v2108, 0.5
        %v2255 = vmul.f32 %v2110, 0.5
        %v2256 = vmul.f32 %v1726, 0.5
        %v2257 = vmul.f32 %v1728, 0.5
        %v2258 = vmul.f32 %v2112, 0.5
        %v2259 = vmul.f32 %v2114, 0.5
        %v2260 = vmul.f32 %v1732, 0.5
        %v2261 = vmul.f32 %v1734, 0.5
        %v2262 = vmul.f32 %v2118, 0.5
        %v2263 = vmul.f32 %v2120, 0.5
        %v2264 = vmul.f32 %v1736, 0.5
        %v2265 = vmul.f32 %v1738, 0.5
        %v2266 = vmul.f32 %v2122, 0.5
        %v2267 = vmul.f32 %v2124, 0.5
        %v2268 = vmul.f32 %v1742, 0.5
        %v2269 = vmul.f32 %v1744, 0.5
        %v2270 = vmul.f32 %v2128, 0.5
        %v2271 = vmul.f32 %v2130, 0.5
        %v2272 = vmul.f32 %v1746, 0.5
        %v2273 = vmul.f32 %v1748, 0.5
        %v2274 = vmul.f32 %v2132, 0.5
        %v2275 = vmul.f32 %v2134, 0.5
        %v2276 = vmul.f32 %v1752, 0.5
        %v2277 = vmul.f32 %v1754, 0.5
        %v2278 = vmul.f32 %v2138, 0.5
        %v2279 = vmul.f32 %v2140, 0.5
        %v2280 = vmul.f32 %v1756, 0.5
        %v2281 = vmul.f32 %v1758, 0.5
        %v2282 = vmul.f32 %v2142, 0.5
        %v2283 = vmul.f32 %v2144, 0.5
        %v2284 = vmul.f32 %v1762, 0.5
        %v2285 = vmul.f32 %v1764, 0.5
        %v2286 = vmul.f32 %v2148, 0.5
        %v2287 = vmul.f32 %v2150, 0.5
        %v2288 = vmul.f32 %v1766, 0.5
        %v2289 = vmul.f32 %v1768, 0.5
        %v2290 = vmul.f32 %v2152, 0.5
        %v2291 = vmul.f32 %v2154, 0.5
        %v2292 = vmul.f32 %v1772, 0.5
        %v2293 = vmul.f32 %v1774, 0.5
        %v2294 = vmul.f32 %v2158, 0.5
        %v2295 = vmul.f32 %v2160, 0.5
        %v2296 = vmul.f32 %v1776, 0.5
        %v2297 = vmul.f32 %v1778, 0.5
        %v2298 = vmul.f32 %v2162, 0.5
        %v2299 = vmul.f32 %v2164, 0.5
        %v2300 = vmul.f32 %v1782, 0.5
        %v2301 = vmul.f32 %v1784, 0.5
        %v2302 = vmul.f32 %v2168, 0.5
        %v2303 = vmul.f32 %v2170, 0.5
        %v2304 = vmul.f32 %v1786, 0.5
        %v2305 = vmul.f32 %v1788, 0.5
        %v2306 = vmul.f32 %v2172, 0.5
        %v2307 = vmul.f32 %v2174, 0.5
        %v2308 = vmul.f32 %v1792, 0.5
        %v2309 = vmul.f32 %v1794, 0.5
        %v2310 = vmul.f32 %v2178, 0.5
        %v2311 = vmul.f32 %v2180, 0.5
        %v2312 = vmul.f32 %v1796, 0.5
        %v2313 = vmul.f32 %v1798, 0.5
        %v2314 = vmul.f32 %v2182, 0.5
        %v2315 = vmul.f32 %v2184, 0.5
        %v2316 = vmul.f32 %v1802, 0.5
        %v2317 = vmul.f32 %v1804, 0.5
        %v2318 = vmul.f32 %v2188, 0.5
        %v2319 = vmul.f32 %v2190, 0.5
        %v2320 = vmul.f32 %v1806, 0.5
        %v2321 = vmul.f32 %v1808, 0.5
        %v2322 = vmul.f32 %v2192, 0.5
        %v2323 = vmul.f32 %v2194, 0.5
        %v2324 = vmul.f32 %v1652, %v1652
        %v2325 = vmul.f32 %v1654, %v1654
        %v2326 = vmul.f32 %v2038, %v2038
        %v2327 = vmul.f32 %v2040, %v2040
        %v2328 = vmul.f32 %v1656, %v1656
        %v2329 = vmul.f32 %v1658, %v1658
        %v2330 = vmul.f32 %v2042, %v2042
        %v2331 = vmul.f32 %v2044, %v2044
        %v2332 = vmul.f32 %v1662, %v1662
        %v2333 = vmul.f32 %v1664, %v1664
        %v2334 = vmul.f32 %v2048, %v2048
        %v2335 = vmul.f32 %v2050, %v2050
        %v2336 = vmul.f32 %v1666, %v1666
        %v2337 = vmul.f32 %v1668, %v1668
        %v2338 = vmul.f32 %v2052, %v2052
        %v2339 = vmul.f32 %v2054, %v2054
        %v2340 = vmul.f32 %v1672, %v1672
        %v2341 = vmul.f32 %v1674, %v1674
        %v2342 = vmul.f32 %v2058, %v2058
        %v2343 = vmul.f32 %v2060, %v2060
        %v2344 = vmul.f32 %v1676, %v1676
        %v2345 = vmul.f32 %v1678, %v1678
        %v2346 = vmul.f32 %v2062, %v2062
        %v2347 = vmul.f32 %v2064, %v2064
        %v2348 = vmul.f32 %v1682, %v1682
        %v2349 = vmul.f32 %v1684, %v1684
        %v2350 = vmul.f32 %v2068, %v2068
        %v2351 = vmul.f32 %v2070, %v2070
        %v2352 = vmul.f32 %v1686, %v1686
        %v2353 = vmul.f32 %v1688, %v1688
        %v2354 = vmul.f32 %v2072, %v2072
        %v2355 = vmul.f32 %v2074, %v2074
        %v2356 = vmul.f32 %v1692, %v1692
        %v2357 = vmul.f32 %v1694, %v1694
        %v2358 = vmul.f32 %v2078, %v2078
        %v2359 = vmul.f32 %v2080, %v2080
        %v2360 = vmul.f32 %v1696, %v1696
        %v2361 = vmul.f32 %v1698, %v1698
        %v2362 = vmul.f32 %v2082, %v2082
        %v2363 = vmul.f32 %v2084, %v2084
        %v2364 = vmul.f32 %v1702, %v1702
        %v2365 = vmul.f32 %v1704, %v1704
        %v2366 = vmul.f32 %v2088, %v2088
        %v2367 = vmul.f32 %v2090, %v2090
        %v2368 = vmul.f32 %v1706, %v1706
        %v2369 = vmul.f32 %v1708, %v1708
        %v2370 = vmul.f32 %v2092, %v2092
        %v2371 = vmul.f32 %v2094, %v2094
        %v2372 = vmul.f32 %v1712, %v1712
        %v2373 = vmul.f32 %v1714, %v1714
        %v2374 = vmul.f32 %v2098, %v2098
        %v2375 = vmul.f32 %v2100, %v2100
        %v2376 = vmul.f32 %v1716, %v1716
        %v2377 = vmul.f32 %v1718, %v1718
        %v2378 = vmul.f32 %v2102, %v2102
        %v2379 = vmul.f32 %v2104, %v2104
        %v2380 = vmul.f32 %v1722, %v1722
        %v2381 = vmul.f32 %v1724, %v1724
        %v2382 = vmul.f32 %v2108, %v2108
        %v2383 = vmul.f32 %v2110, %v2110
        %v2384 = vmul.f32 %v1726, %v1726
        %v2385 = vmul.f32 %v1728, %v1728
        %v2386 = vmul.f32 %v2112, %v2112
        %v2387 = vmul.f32 %v2114, %v2114
        %v2388 = vmul.f32 %v1732, %v1732
        %v2389 = vmul.f32 %v1734, %v1734
        %v2390 = vmul.f32 %v2118, %v2118
        %v2391 = vmul.f32 %v2120, %v2120
        %v2392 = vmul.f32 %v1736, %v1736
        %v2393 = vmul.f32 %v1738, %v1738
        %v2394 = vmul.f32 %v2122, %v2122
        %v2395 = vmul.f32 %v2124, %v2124
        %v2396 = vmul.f32 %v1742, %v1742
        %v2397 = vmul.f32 %v1744, %v1744
        %v2398 = vmul.f32 %v2128, %v2128
        %v2399 = vmul.f32 %v2130, %v2130
        %v2400 = vmul.f32 %v1746, %v1746
        %v2401 = vmul.f32 %v1748, %v1748
        %v2402 = vmul.f32 %v2132, %v2132
        %v2403 = vmul.f32 %v2134, %v2134
        %v2404 = vmul.f32 %v1752, %v1752
        %v2405 = vmul.f32 %v1754, %v1754
        %v2406 = vmul.f32 %v2138, %v2138
        %v2407 = vmul.f32 %v2140, %v2140
        %v2408 = vmul.f32 %v1756, %v1756
        %v2409 = vmul.f32 %v1758, %v1758
        %v2410 = vmul.f32 %v2142, %v2142
        %v2411 = vmul.f32 %v2144, %v2144
        %v2412 = vmul.f32 %v1762, %v1762
        %v2413 = vmul.f32 %v1764, %v1764
        %v2414 = vmul.f32 %v2148, %v2148
        %v2415 = vmul.f32 %v2150, %v2150
        %v2416 = vmul.f32 %v1766, %v1766
        %v2417 = vmul.f32 %v1768, %v1768
        %v2418 = vmul.f32 %v2152, %v2152
        %v2419 = vmul.f32 %v2154, %v2154
        %v2420 = vmul.f32 %v1772, %v1772
        %v2421 = vmul.f32 %v1774, %v1774
        %v2422 = vmul.f32 %v2158, %v2158
        %v2423 = vmul.f32 %v2160, %v2160
        %v2424 = vmul.f32 %v1776, %v1776
        %v2425 = vmul.f32 %v1778, %v1778
        %v2426 = vmul.f32 %v2162, %v2162
        %v2427 = vmul.f32 %v2164, %v2164
        %v2428 = vmul.f32 %v1782, %v1782
        %v2429 = vmul.f32 %v1784, %v1784
        %v2430 = vmul.f32 %v2168, %v2168
        %v2431 = vmul.f32 %v2170, %v2170
        %v2432 = vmul.f32 %v1786, %v1786
        %v2433 = vmul.f32 %v1788, %v1788
        %v2434 = vmul.f32 %v2172, %v2172
        %v2435 = vmul.f32 %v2174, %v2174
        %v2436 = vmul.f32 %v1792, %v1792
        %v2437 = vmul.f32 %v1794, %v1794
        %v2438 = vmul.f32 %v2178, %v2178
        %v2439 = vmul.f32 %v2180, %v2180
        %v2440 = vmul.f32 %v1796, %v1796
        %v2441 = vmul.f32 %v1798, %v1798
        %v2442 = vmul.f32 %v2182, %v2182
        %v2443 = vmul.f32 %v2184, %v2184
        %v2444 = vmul.f32 %v1802, %v1802
        %v2445 = vmul.f32 %v1804, %v1804
        %v2446 = vmul.f32 %v2188, %v2188
        %v2447 = vmul.f32 %v2190, %v2190
        %v2448 = vmul.f32 %v1806, %v1806
        %v2449 = vmul.f32 %v1808, %v1808
        %v2450 = vmul.f32 %v2192, %v2192
        %v2451 = vmul.f32 %v2194, %v2194
        %v2452 = vadd.f32 %v2324, 1.0
        %v2453 = vadd.f32 %v2325, 1.0
        %v2454 = vadd.f32 %v2326, 1.0
        %v2455 = vadd.f32 %v2327, 1.0
        %v2456 = vadd.f32 %v2328, 1.0
        %v2457 = vadd.f32 %v2329, 1.0
        %v2458 = vadd.f32 %v2330, 1.0
        %v2459 = vadd.f32 %v2331, 1.0
        %v2460 = vadd.f32 %v2332, 1.0
        %v2461 = vadd.f32 %v2333, 1.0
        %v2462 = vadd.f32 %v2334, 1.0
        %v2463 = vadd.f32 %v2335, 1.0
        %v2464 = vadd.f32 %v2336, 1.0
        %v2465 = vadd.f32 %v2337, 1.0
        %v2466 = vadd.f32 %v2338, 1.0
        %v2467 = vadd.f32 %v2339, 1.0
        %v2468 = vadd.f32 %v2340, 1.0
        %v2469 = vadd.f32 %v2341, 1.0
        %v2470 = vadd.f32 %v2342, 1.0
        %v2471 = vadd.f32 %v2343, 1.0
        %v2472 = vadd.f32 %v2344, 1.0
        %v2473 = vadd.f32 %v2345, 1.0
        %v2474 = vadd.f32 %v2346, 1.0
        %v2475 = vadd.f32 %v2347, 1.0
        %v2476 = vadd.f32 %v2348, 1.0
        %v2477 = vadd.f32 %v2349, 1.0
        %v2478 = vadd.f32 %v2350, 1.0
        %v2479 = vadd.f32 %v2351, 1.0
        %v2480 = vadd.f32 %v2352, 1.0
        %v2481 = vadd.f32 %v2353, 1.0
        %v2482 = vadd.f32 %v2354, 1.0
        %v2483 = vadd.f32 %v2355, 1.0
        %v2484 = vadd.f32 %v2356, 1.0
        %v2485 = vadd.f32 %v2357, 1.0
        %v2486 = vadd.f32 %v2358, 1.0
        %v2487 = vadd.f32 %v2359, 1.0
        %v2488 = vadd.f32 %v2360, 1.0
        %v2489 = vadd.f32 %v2361, 1.0
        %v2490 = vadd.f32 %v2362, 1.0
        %v2491 = vadd.f32 %v2363, 1.0
        %v2492 = vadd.f32 %v2364, 1.0
        %v2493 = vadd.f32 %v2365, 1.0
        %v2494 = vadd.f32 %v2366, 1.0
        %v2495 = vadd.f32 %v2367, 1.0
        %v2496 = vadd.f32 %v2368, 1.0
        %v2497 = vadd.f32 %v2369, 1.0
        %v2498 = vadd.f32 %v2370, 1.0
        %v2499 = vadd.f32 %v2371, 1.0
        %v2500 = vadd.f32 %v2372, 1.0
        %v2501 = vadd.f32 %v2373, 1.0
        %v2502 = vadd.f32 %v2374, 1.0
        %v2503 = vadd.f32 %v2375, 1.0
        %v2504 = vadd.f32 %v2376, 1.0
        %v2505 = vadd.f32 %v2377, 1.0
        %v2506 = vadd.f32 %v2378, 1.0
        %v2507 = vadd.f32 %v2379, 1.0
        %v2508 = vadd.f32 %v2380, 1.0
        %v2509 = vadd.f32 %v2381, 1.0
        %v2510 = vadd.f32 %v2382, 1.0
        %v2511 = vadd.f32 %v2383, 1.0
        %v2512 = vadd.f32 %v2384, 1.0
        %v2513 = vadd.f32 %v2385, 1.0
        %v2514 = vadd.f32 %v2386, 1.0
        %v2515 = vadd.f32 %v2387, 1.0
        %v2516 = vadd.f32 %v2388, 1.0
        %v2517 = vadd.f32 %v2389, 1.0
        %v2518 = vadd.f32 %v2390, 1.0
        %v2519 = vadd.f32 %v2391, 1.0
        %v2520 = vadd.f32 %v2392, 1.0
        %v2521 = vadd.f32 %v2393, 1.0
        %v2522 = vadd.f32 %v2394, 1.0
        %v2523 = vadd.f32 %v2395, 1.0
        %v2524 = vadd.f32 %v2396, 1.0
        %v2525 = vadd.f32 %v2397, 1.0
        %v2526 = vadd.f32 %v2398, 1.0
        %v2527 = vadd.f32 %v2399, 1.0
        %v2528 = vadd.f32 %v2400, 1.0
        %v2529 = vadd.f32 %v2401, 1.0
        %v2530 = vadd.f32 %v2402, 1.0
        %v2531 = vadd.f32 %v2403, 1.0
        %v2532 = vadd.f32 %v2404, 1.0
        %v2533 = vadd.f32 %v2405, 1.0
        %v2534 = vadd.f32 %v2406, 1.0
        %v2535 = vadd.f32 %v2407, 1.0
        %v2536 = vadd.f32 %v2408, 1.0
        %v2537 = vadd.f32 %v2409, 1.0
        %v2538 = vadd.f32 %v2410, 1.0
        %v2539 = vadd.f32 %v2411, 1.0
        %v2540 = vadd.f32 %v2412, 1.0
        %v2541 = vadd.f32 %v2413, 1.0
        %v2542 = vadd.f32 %v2414, 1.0
        %v2543 = vadd.f32 %v2415, 1.0
        %v2544 = vadd.f32 %v2416, 1.0
        %v2545 = vadd.f32 %v2417, 1.0
        %v2546 = vadd.f32 %v2418, 1.0
        %v2547 = vadd.f32 %v2419, 1.0
        %v2548 = vadd.f32 %v2420, 1.0
        %v2549 = vadd.f32 %v2421, 1.0
        %v2550 = vadd.f32 %v2422, 1.0
        %v2551 = vadd.f32 %v2423, 1.0
        %v2552 = vadd.f32 %v2424, 1.0
        %v2553 = vadd.f32 %v2425, 1.0
        %v2554 = vadd.f32 %v2426, 1.0
        %v2555 = vadd.f32 %v2427, 1.0
        %v2556 = vadd.f32 %v2428, 1.0
        %v2557 = vadd.f32 %v2429, 1.0
        %v2558 = vadd.f32 %v2430, 1.0
        %v2559 = vadd.f32 %v2431, 1.0
        %v2560 = vadd.f32 %v2432, 1.0
        %v2561 = vadd.f32 %v2433, 1.0
        %v2562 = vadd.f32 %v2434, 1.0
        %v2563 = vadd.f32 %v2435, 1.0
        %v2564 = vadd.f32 %v2436, 1.0
        %v2565 = vadd.f32 %v2437, 1.0
        %v2566 = vadd.f32 %v2438, 1.0
        %v2567 = vadd.f32 %v2439, 1.0
        %v2568 = vadd.f32 %v2440, 1.0
        %v2569 = vadd.f32 %v2441, 1.0
        %v2570 = vadd.f32 %v2442, 1.0
        %v2571 = vadd.f32 %v2443, 1.0
        %v2572 = vadd.f32 %v2444, 1.0
        %v2573 = vadd.f32 %v2445, 1.0
        %v2574 = vadd.f32 %v2446, 1.0
        %v2575 = vadd.f32 %v2447, 1.0
        %v2576 = vadd.f32 %v2448, 1.0
        %v2577 = vadd.f32 %v2449, 1.0
        %v2578 = vadd.f32 %v2450, 1.0
        %v2579 = vadd.f32 %v2451, 1.0
        %v2580 = vrsqrt.pop %v2452
        %v2581 = vrsqrt.pop %v2453
        %v2582 = vrsqrt.pop %v2454
        %v2583 = vrsqrt.pop %v2455
        %v2584 = vrsqrt.pop %v2456
        %v2585 = vrsqrt.pop %v2457
        %v2586 = vrsqrt.pop %v2458
        %v2587 = vrsqrt.pop %v2459
        %v2588 = vrsqrt.pop %v2460
        %v2589 = vrsqrt.pop %v2461
        %v2590 = vrsqrt.pop %v2462
        %v2591 = vrsqrt.pop %v2463
        %v2592 = vrsqrt.pop %v2464
        %v2593 = vrsqrt.pop %v2465
        %v2594 = vrsqrt.pop %v2466
        %v2595 = vrsqrt.pop %v2467
        %v2596 = vrsqrt.pop %v2468
        %v2597 = vrsqrt.pop %v2469
        %v2598 = vrsqrt.pop %v2470
        %v2599 = vrsqrt.pop %v2471
        %v2600 = vrsqrt.pop %v2472
        %v2601 = vrsqrt.pop %v2473
        %v2602 = vrsqrt.pop %v2474
        %v2603 = vrsqrt.pop %v2475
        %v2604 = vrsqrt.pop %v2476
        %v2605 = vrsqrt.pop %v2477
        %v2606 = vrsqrt.pop %v2478
        %v2607 = vrsqrt.pop %v2479
        %v2608 = vrsqrt.pop %v2480
        %v2609 = vrsqrt.pop %v2481
        %v2610 = vrsqrt.pop %v2482
        %v2611 = vrsqrt.pop %v2483
        %v2612 = vrsqrt.pop %v2484
        %v2613 = vrsqrt.pop %v2485
        %v2614 = vrsqrt.pop %v2486
        %v2615 = vrsqrt.pop %v2487
        %v2616 = vrsqrt.pop %v2488
        %v2617 = vrsqrt.pop %v2489
        %v2618 = vrsqrt.pop %v2490
        %v2619 = vrsqrt.pop %v2491
        %v2620 = vrsqrt.pop %v2492
        %v2621 = vrsqrt.pop %v2493
        %v2622 = vrsqrt.pop %v2494
        %v2623 = vrsqrt.pop %v2495
        %v2624 = vrsqrt.pop %v2496
        %v2625 = vrsqrt.pop %v2497
        %v2626 = vrsqrt.pop %v2498
        %v2627 = vrsqrt.pop %v2499
        %v2628 = vrsqrt.pop %v2500
        %v2629 = vrsqrt.pop %v2501
        %v2630 = vrsqrt.pop %v2502
        %v2631 = vrsqrt.pop %v2503
        %v2632 = vrsqrt.pop %v2504
        %v2633 = vrsqrt.pop %v2505
        %v2634 = vrsqrt.pop %v2506
        %v2635 = vrsqrt.pop %v2507
        %v2636 = vrsqrt.pop %v2508
        %v2637 = vrsqrt.pop %v2509
        %v2638 = vrsqrt.pop %v2510
        %v2639 = vrsqrt.pop %v2511
        %v2640 = vrsqrt.pop %v2512
        %v2641 = vrsqrt.pop %v2513
        %v2642 = vrsqrt.pop %v2514
        %v2643 = vrsqrt.pop %v2515
        %v2644 = vrsqrt.pop %v2516
        %v2645 = vrsqrt.pop %v2517
        %v2646 = vrsqrt.pop %v2518
        %v2647 = vrsqrt.pop %v2519
        %v2648 = vrsqrt.pop %v2520
        %v2649 = vrsqrt.pop %v2521
        %v2650 = vrsqrt.pop %v2522
        %v2651 = vrsqrt.pop %v2523
        %v2652 = vrsqrt.pop %v2524
        %v2653 = vrsqrt.pop %v2525
        %v2654 = vrsqrt.pop %v2526
        %v2655 = vrsqrt.pop %v2527
        %v2656 = vrsqrt.pop %v2528
        %v2657 = vrsqrt.pop %v2529
        %v2658 = vrsqrt.pop %v2530
        %v2659 = vrsqrt.pop %v2531
        %v2660 = vrsqrt.pop %v2532
        %v2661 = vrsqrt.pop %v2533
        %v2662 = vrsqrt.pop %v2534
        %v2663 = vrsqrt.pop %v2535
        %v2664 = vrsqrt.pop %v2536
        %v2665 = vrsqrt.pop %v2537
        %v2666 = vrsqrt.pop %v2538
        %v2667 = vrsqrt.pop %v2539
        %v2668 = vrsqrt.pop %v2540
        %v2669 = vrsqrt.pop %v2541
        %v2670 = vrsqrt.pop %v2542
        %v2671 = vrsqrt.pop %v2543
        %v2672 = vrsqrt.pop %v2544
        %v2673 = vrsqrt.pop %v2545
        %v2674 = vrsqrt.pop %v2546
        %v2675 = vrsqrt.pop %v2547
        %v2676 = vrsqrt.pop %v2548
        %v2677 = vrsqrt.pop %v2549
        %v2678 = vrsqrt.pop %v2550
        %v2679 = vrsqrt.pop %v2551
        %v2680 = vrsqrt.pop %v2552
        %v2681 = vrsqrt.pop %v2553
        %v2682 = vrsqrt.pop %v2554
        %v2683 = vrsqrt.pop %v2555
        %v2684 = vrsqrt.pop %v2556
        %v2685 = vrsqrt.pop %v2557
        %v2686 = vrsqrt.pop %v2558
        %v2687 = vrsqrt.pop %v2559
        %v2688 = vrsqrt.pop %v2560
        %v2689 = vrsqrt.pop %v2561
        %v2690 = vrsqrt.pop %v2562
        %v2691 = vrsqrt.pop %v2563
        %v2692 = vrsqrt.pop %v2564
        %v2693 = vrsqrt.pop %v2565
        %v2694 = vrsqrt.pop %v2566
        %v2695 = vrsqrt.pop %v2567
        %v2696 = vrsqrt.pop %v2568
        %v2697 = vrsqrt.pop %v2569
        %v2698 = vrsqrt.pop %v2570
        %v2699 = vrsqrt.pop %v2571
        %v2700 = vrsqrt.pop %v2572
        %v2701 = vrsqrt.pop %v2573
        %v2702 = vrsqrt.pop %v2574
        %v2703 = vrsqrt.pop %v2575
        %v2704 = vrsqrt.pop %v2576
        %v2705 = vrsqrt.pop %v2577
        %v2706 = vrsqrt.pop %v2578
        %v2707 = vrsqrt.pop %v2579
        %v2708 = vmul.f32 %v2196, %v2580
        %v2709 = vmul.f32 %v2197, %v2581
        %v2710 = vmul.f32 %v2198, %v2582
        %v2711 = vmul.f32 %v2199, %v2583
        %v2712 = vmul.f32 %v2200, %v2584
        %v2713 = vmul.f32 %v2201, %v2585
        %v2714 = vmul.f32 %v2202, %v2586
        %v2715 = vmul.f32 %v2203, %v2587
        %v2716 = vmul.f32 %v2204, %v2588
        %v2717 = vmul.f32 %v2205, %v2589
        %v2718 = vmul.f32 %v2206, %v2590
        %v2719 = vmul.f32 %v2207, %v2591
        %v2720 = vmul.f32 %v2208, %v2592
        %v2721 = vmul.f32 %v2209, %v2593
        %v2722 = vmul.f32 %v2210, %v2594
        %v2723 = vmul.f32 %v2211, %v2595
        %v2724 = vmul.f32 %v2212, %v2596
        %v2725 = vmul.f32 %v2213, %v2597
        %v2726 = vmul.f32 %v2214, %v2598
        %v2727 = vmul.f32 %v2215, %v2599
        %v2728 = vmul.f32 %v2216, %v2600
        %v2729 = vmul.f32 %v2217, %v2601
        %v2730 = vmul.f32 %v2218, %v2602
        %v2731 = vmul.f32 %v2219, %v2603
        %v2732 = vmul.f32 %v2220, %v2604
        %v2733 = vmul.f32 %v2221, %v2605
        %v2734 = vmul.f32 %v2222, %v2606
        %v2735 = vmul.f32 %v2223, %v2607
        %v2736 = vmul.f32 %v2224, %v2608
        %v2737 = vmul.f32 %v2225, %v2609
        %v2738 = vmul.f32 %v2226, %v2610
        %v2739 = vmul.f32 %v2227, %v2611
        %v2740 = vmul.f32 %v2228, %v2612
        %v2741 = vmul.f32 %v2229, %v2613
        %v2742 = vmul.f32 %v2230, %v2614
        %v2743 = vmul.f32 %v2231, %v2615
        %v2744 = vmul.f32 %v2232, %v2616
        %v2745 = vmul.f32 %v2233, %v2617
        %v2746 = vmul.f32 %v2234, %v2618
        %v2747 = vmul.f32 %v2235, %v2619
        %v2748 = vmul.f32 %v2236, %v2620
        %v2749 = vmul.f32 %v2237, %v2621
        %v2750 = vmul.f32 %v2238, %v2622
        %v2751 = vmul.f32 %v2239, %v2623
        %v2752 = vmul.f32 %v2240, %v2624
        %v2753 = vmul.f32 %v2241, %v2625
        %v2754 = vmul.f32 %v2242, %v2626
        %v2755 = vmul.f32 %v2243, %v2627
        %v2756 = vmul.f32 %v2244, %v2628
        %v2757 = vmul.f32 %v2245, %v2629
        %v2758 = vmul.f32 %v2246, %v2630
        %v2759 = vmul.f32 %v2247, %v2631
        %v2760 = vmul.f32 %v2248, %v2632
        %v2761 = vmul.f32 %v2249, %v2633
        %v2762 = vmul.f32 %v2250, %v2634
        %v2763 = vmul.f32 %v2251, %v2635
        %v2764 = vmul.f32 %v2252, %v2636
        %v2765 = vmul.f32 %v2253, %v2637
        %v2766 = vmul.f32 %v2254, %v2638
        %v2767 = vmul.f32 %v2255, %v2639
        %v2768 = vmul.f32 %v2256, %v2640
        %v2769 = vmul.f32 %v2257, %v2641
        %v2770 = vmul.f32 %v2258, %v2642
        %v2771 = vmul.f32 %v2259, %v2643
        %v2772 = vmul.f32 %v2260, %v2644
        %v2773 = vmul.f32 %v2261, %v2645
        %v2774 = vmul.f32 %v2262, %v2646
        %v2775 = vmul.f32 %v2263, %v2647
        %v2776 = vmul.f32 %v2264, %v2648
        %v2777 = vmul.f32 %v2265, %v2649
        %v2778 = vmul.f32 %v2266, %v2650
        %v2779 = vmul.f32 %v2267, %v2651
        %v2780 = vmul.f32 %v2268, %v2652
        %v2781 = vmul.f32 %v2269, %v2653
        %v2782 = vmul.f32 %v2270, %v2654
        %v2783 = vmul.f32 %v2271, %v2655
        %v2784 = vmul.f32 %v2272, %v2656
        %v2785 = vmul.f32 %v2273, %v2657
        %v2786 = vmul.f32 %v2274, %v2658
        %v2787 = vmul.f32 %v2275, %v2659
        %v2788 = vmul.f32 %v2276, %v2660
        %v2789 = vmul.f32 %v2277, %v2661
        %v2790 = vmul.f32 %v2278, %v2662
        %v2791 = vmul.f32 %v2279, %v2663
        %v2792 = vmul.f32 %v2280, %v2664
        %v2793 = vmul.f32 %v2281, %v2665
        %v2794 = vmul.f32 %v2282, %v2666
        %v2795 = vmul.f32 %v2283, %v2667
        %v2796 = vmul.f32 %v2284, %v2668
        %v2797 = vmul.f32 %v2285, %v2669
        %v2798 = vmul.f32 %v2286, %v2670
        %v2799 = vmul.f32 %v2287, %v2671
        %v2800 = vmul.f32 %v2288, %v2672
        %v2801 = vmul.f32 %v2289, %v2673
        %v2802 = vmul.f32 %v2290, %v2674
        %v2803 = vmul.f32 %v2291, %v2675
        %v2804 = vmul.f32 %v2292, %v2676
        %v2805 = vmul.f32 %v2293, %v2677
        %v2806 = vmul.f32 %v2294, %v2678
        %v2807 = vmul.f32 %v2295, %v2679
        %v2808 = vmul.f32 %v2296, %v2680
        %v2809 = vmul.f32 %v2297, %v2681
        %v2810 = vmul.f32 %v2298, %v2682
        %v2811 = vmul.f32 %v2299, %v2683
        %v2812 = vmul.f32 %v2300, %v2684
        %v2813 = vmul.f32 %v2301, %v2685
        %v2814 = vmul.f32 %v2302, %v2686
        %v2815 = vmul.f32 %v2303, %v2687
        %v2816 = vmul.f32 %v2304, %v2688
        %v2817 = vmul.f32 %v2305, %v2689
        %v2818 = vmul.f32 %v2306, %v2690
        %v2819 = vmul.f32 %v2307, %v2691
        %v2820 = vmul.f32 %v2308, %v2692
        %v2821 = vmul.f32 %v2309, %v2693
        %v2822 = vmul.f32 %v2310, %v2694
        %v2823 = vmul.f32 %v2311, %v2695
        %v2824 = vmul.f32 %v2312, %v2696
        %v2825 = vmul.f32 %v2313, %v2697
        %v2826 = vmul.f32 %v2314, %v2698
        %v2827 = vmul.f32 %v2315, %v2699
        %v2828 = vmul.f32 %v2316, %v2700
        %v2829 = vmul.f32 %v2317, %v2701
        %v2830 = vmul.f32 %v2318, %v2702
        %v2831 = vmul.f32 %v2319, %v2703
        %v2832 = vmul.f32 %v2320, %v2704
        %v2833 = vmul.f32 %v2321, %v2705
        %v2834 = vmul.f32 %v2322, %v2706
        %v2835 = vmul.f32 %v2323, %v2707
        %v2836 = vadd.f32 %v2708, 0.5
        %v2837 = vadd.f32 %v2709, 0.5
        %v2838 = vadd.f32 %v2710, 0.5
        %v2839 = vadd.f32 %v2711, 0.5
        %v2840 = vadd.f32 %v2712, 0.5
        %v2841 = vadd.f32 %v2713, 0.5
        %v2842 = vadd.f32 %v2714, 0.5
        %v2843 = vadd.f32 %v2715, 0.5
        %v2844 = vadd.f32 %v2716, 0.5
        %v2845 = vadd.f32 %v2717, 0.5
        %v2846 = vadd.f32 %v2718, 0.5
        %v2847 = vadd.f32 %v2719, 0.5
        %v2848 = vadd.f32 %v2720, 0.5
        %v2849 = vadd.f32 %v2721, 0.5
        %v2850 = vadd.f32 %v2722, 0.5
        %v2851 = vadd.f32 %v2723, 0.5
        %v2852 = vadd.f32 %v2724, 0.5
        %v2853 = vadd.f32 %v2725, 0.5
        %v2854 = vadd.f32 %v2726, 0.5
        %v2855 = vadd.f32 %v2727, 0.5
        %v2856 = vadd.f32 %v2728, 0.5
        %v2857 = vadd.f32 %v2729, 0.5
        %v2858 = vadd.f32 %v2730, 0.5
        %v2859 = vadd.f32 %v2731, 0.5
        %v2860 = vadd.f32 %v2732, 0.5
        %v2861 = vadd.f32 %v2733, 0.5
        %v2862 = vadd.f32 %v2734, 0.5
        %v2863 = vadd.f32 %v2735, 0.5
        %v2864 = vadd.f32 %v2736, 0.5
        %v2865 = vadd.f32 %v2737, 0.5
        %v2866 = vadd.f32 %v2738, 0.5
        %v2867 = vadd.f32 %v2739, 0.5
        %v2868 = vadd.f32 %v2740, 0.5
        %v2869 = vadd.f32 %v2741, 0.5
        %v2870 = vadd.f32 %v2742, 0.5
        %v2871 = vadd.f32 %v2743, 0.5
        %v2872 = vadd.f32 %v2744, 0.5
        %v2873 = vadd.f32 %v2745, 0.5
        %v2874 = vadd.f32 %v2746, 0.5
        %v2875 = vadd.f32 %v2747, 0.5
        %v2876 = vadd.f32 %v2748, 0.5
        %v2877 = vadd.f32 %v2749, 0.5
        %v2878 = vadd.f32 %v2750, 0.5
        %v2879 = vadd.f32 %v2751, 0.5
        %v2880 = vadd.f32 %v2752, 0.5
        %v2881 = vadd.f32 %v2753, 0.5
        %v2882 = vadd.f32 %v2754, 0.5
        %v2883 = vadd.f32 %v2755, 0.5
        %v2884 = vadd.f32 %v2756, 0.5
        %v2885 = vadd.f32 %v2757, 0.5
        %v2886 = vadd.f32 %v2758, 0.5
        %v2887 = vadd.f32 %v2759, 0.5
        %v2888 = vadd.f32 %v2760, 0.5
        %v2889 = vadd.f32 %v2761, 0.5
        %v2890 = vadd.f32 %v2762, 0.5
        %v2891 = vadd.f32 %v2763, 0.5
        %v2892 = vadd.f32 %v2764, 0.5
        %v2893 = vadd.f32 %v2765, 0.5
        %v2894 = vadd.f32 %v2766, 0.5
        %v2895 = vadd.f32 %v2767, 0.5
        %v2896 = vadd.f32 %v2768, 0.5
        %v2897 = vadd.f32 %v2769, 0.5
        %v2898 = vadd.f32 %v2770, 0.5
        %v2899 = vadd.f32 %v2771, 0.5
        %v2900 = vadd.f32 %v2772, 0.5
        %v2901 = vadd.f32 %v2773, 0.5
        %v2902 = vadd.f32 %v2774, 0.5
        %v2903 = vadd.f32 %v2775, 0.5
        %v2904 = vadd.f32 %v2776, 0.5
        %v2905 = vadd.f32 %v2777, 0.5
        %v2906 = vadd.f32 %v2778, 0.5
        %v2907 = vadd.f32 %v2779, 0.5
        %v2908 = vadd.f32 %v2780, 0.5
        %v2909 = vadd.f32 %v2781, 0.5
        %v2910 = vadd.f32 %v2782, 0.5
        %v2911 = vadd.f32 %v2783, 0.5
        %v2912 = vadd.f32 %v2784, 0.5
        %v2913 = vadd.f32 %v2785, 0.5
        %v2914 = vadd.f32 %v2786, 0.5
        %v2915 = vadd.f32 %v2787, 0.5
        %v2916 = vadd.f32 %v2788, 0.5
        %v2917 = vadd.f32 %v2789, 0.5
        %v2918 = vadd.f32 %v2790, 0.5
        %v2919 = vadd.f32 %v2791, 0.5
        %v2920 = vadd.f32 %v2792, 0.5
        %v2921 = vadd.f32 %v2793, 0.5
        %v2922 = vadd.f32 %v2794, 0.5
        %v2923 = vadd.f32 %v2795, 0.5
        %v2924 = vadd.f32 %v2796, 0.5
        %v2925 = vadd.f32 %v2797, 0.5
        %v2926 = vadd.f32 %v2798, 0.5
        %v2927 = vadd.f32 %v2799, 0.5
        %v2928 = vadd.f32 %v2800, 0.5
        %v2929 = vadd.f32 %v2801, 0.5
        %v2930 = vadd.f32 %v2802, 0.5
        %v2931 = vadd.f32 %v2803, 0.5
        %v2932 = vadd.f32 %v2804, 0.5
        %v2933 = vadd.f32 %v2805, 0.5
        %v2934 = vadd.f32 %v2806, 0.5
        %v2935 = vadd.f32 %v2807, 0.5
        %v2936 = vadd.f32 %v2808, 0.5
        %v2937 = vadd.f32 %v2809, 0.5
        %v2938 = vadd.f32 %v2810, 0.5
        %v2939 = vadd.f32 %v2811, 0.5
        %v2940 = vadd.f32 %v2812, 0.5
        %v2941 = vadd.f32 %v2813, 0.5
        %v2942 = vadd.f32 %v2814, 0.5
        %v2943 = vadd.f32 %v2815, 0.5
        %v2944 = vadd.f32 %v2816, 0.5
        %v2945 = vadd.f32 %v2817, 0.5
        %v2946 = vadd.f32 %v2818, 0.5
        %v2947 = vadd.f32 %v2819, 0.5
        %v2948 = vadd.f32 %v2820, 0.5
        %v2949 = vadd.f32 %v2821, 0.5
        %v2950 = vadd.f32 %v2822, 0.5
        %v2951 = vadd.f32 %v2823, 0.5
        %v2952 = vadd.f32 %v2824, 0.5
        %v2953 = vadd.f32 %v2825, 0.5
        %v2954 = vadd.f32 %v2826, 0.5
        %v2955 = vadd.f32 %v2827, 0.5
        %v2956 = vadd.f32 %v2828, 0.5
        %v2957 = vadd.f32 %v2829, 0.5
        %v2958 = vadd.f32 %v2830, 0.5
        %v2959 = vadd.f32 %v2831, 0.5
        %v2960 = vadd.f32 %v2832, 0.5
        %v2961 = vadd.f32 %v2833, 0.5
        %v2962 = vadd.f32 %v2834, 0.5
        %v2963 = vadd.f32 %v2835, 0.5
        %2964 = vst [vmem:[%s240] sm:$0xff] %v2836
        %2965 = vst [vmem:[%s240 + $0x8] sm:$0xff] %v2837
        %2966 = vst [vmem:[%s240 + $0x10] sm:$0xff] %v2838
        %2967 = vst [vmem:[%s240 + $0x18] sm:$0xff] %v2839
        %2968 = vst [vmem:[%s240 + $0x20] sm:$0xff] %v2840
        %2969 = vst [vmem:[%s240 + $0x28] sm:$0xff] %v2841
        %2970 = vst [vmem:[%s240 + $0x30] sm:$0xff] %v2842
        %2971 = vst [vmem:[%s240 + $0x38] sm:$0xff] %v2843
        %2972 = vst [vmem:[%s240 + $0x40] sm:$0xff] %v2844
        %2973 = vst [vmem:[%s240 + $0x48] sm:$0xff] %v2845
        %2974 = vst [vmem:[%s240 + $0x50] sm:$0xff] %v2846
        %2975 = vst [vmem:[%s240 + $0x58] sm:$0xff] %v2847
        %2976 = vst [vmem:[%s240 + $0x60] sm:$0xff] %v2848
        %2977 = vst [vmem:[%s240 + $0x68] sm:$0xff] %v2849
        %2978 = vst [vmem:[%s240 + $0x70] sm:$0xff] %v2850
        %2979 = vst [vmem:[%s240 + $0x78] sm:$0xff] %v2851
        %2980 = vst [vmem:[%s240 + $0x80] sm:$0xff] %v2852
        %2981 = vst [vmem:[%s240 + $0x88] sm:$0xff] %v2853
        %2982 = vst [vmem:[%s240 + $0x90] sm:$0xff] %v2854
        %2983 = vst [vmem:[%s240 + $0x98] sm:$0xff] %v2855
        %2984 = vst [vmem:[%s240 + $0xa0] sm:$0xff] %v2856
        %2985 = vst [vmem:[%s240 + $0xa8] sm:$0xff] %v2857
        %2986 = vst [vmem:[%s240 + $0xb0] sm:$0xff] %v2858
        %2987 = vst [vmem:[%s240 + $0xb8] sm:$0xff] %v2859
        %2988 = vst [vmem:[%s240 + $0xc0] sm:$0xff] %v2860
        %2989 = vst [vmem:[%s240 + $0xc8] sm:$0xff] %v2861
        %2990 = vst [vmem:[%s240 + $0xd0] sm:$0xff] %v2862
        %2991 = vst [vmem:[%s240 + $0xd8] sm:$0xff] %v2863
        %2992 = vst [vmem:[%s240 + $0xe0] sm:$0xff] %v2864
        %2993 = vst [vmem:[%s240 + $0xe8] sm:$0xff] %v2865
        %2994 = vst [vmem:[%s240 + $0xf0] sm:$0xff] %v2866
        %2995 = vst [vmem:[%s240 + $0xf8] sm:$0xff] %v2867
        %2996 = vst [vmem:[%s240 + $0x100] sm:$0xff] %v2868
        %2997 = vst [vmem:[%s240 + $0x108] sm:$0xff] %v2869
        %2998 = vst [vmem:[%s240 + $0x110] sm:$0xff] %v2870
        %2999 = vst [vmem:[%s240 + $0x118] sm:$0xff] %v2871
        %3000 = vst [vmem:[%s240 + $0x120] sm:$0xff] %v2872
        %3001 = vst [vmem:[%s240 + $0x128] sm:$0xff] %v2873
        %3002 = vst [vmem:[%s240 + $0x130] sm:$0xff] %v2874
        %3003 = vst [vmem:[%s240 + $0x138] sm:$0xff] %v2875
        %3004 = vst [vmem:[%s240 + $0x140] sm:$0xff] %v2876
        %3005 = vst [vmem:[%s240 + $0x148] sm:$0xff] %v2877
        %3006 = vst [vmem:[%s240 + $0x150] sm:$0xff] %v2878
        %3007 = vst [vmem:[%s240 + $0x158] sm:$0xff] %v2879
        %3008 = vst [vmem:[%s240 + $0x160] sm:$0xff] %v2880
        %3009 = vst [vmem:[%s240 + $0x168] sm:$0xff] %v2881
        %3010 = vst [vmem:[%s240 + $0x170] sm:$0xff] %v2882
        %3011 = vst [vmem:[%s240 + $0x178] sm:$0xff] %v2883
        %3012 = vst [vmem:[%s240 + $0x180] sm:$0xff] %v2884
        %3013 = vst [vmem:[%s240 + $0x188] sm:$0xff] %v2885
        %3014 = vst [vmem:[%s240 + $0x190] sm:$0xff] %v2886
        %3015 = vst [vmem:[%s240 + $0x198] sm:$0xff] %v2887
        %3016 = vst [vmem:[%s240 + $0x1a0] sm:$0xff] %v2888
        %3017 = vst [vmem:[%s240 + $0x1a8] sm:$0xff] %v2889
        %3018 = vst [vmem:[%s240 + $0x1b0] sm:$0xff] %v2890
        %3019 = vst [vmem:[%s240 + $0x1b8] sm:$0xff] %v2891
        %3020 = vst [vmem:[%s240 + $0x1c0] sm:$0xff] %v2892
        %3021 = vst [vmem:[%s240 + $0x1c8] sm:$0xff] %v2893
        %3022 = vst [vmem:[%s240 + $0x1d0] sm:$0xff] %v2894
        %3023 = vst [vmem:[%s240 + $0x1d8] sm:$0xff] %v2895
        %3024 = vst [vmem:[%s240 + $0x1e0] sm:$0xff] %v2896
        %3025 = vst [vmem:[%s240 + $0x1e8] sm:$0xff] %v2897
        %3026 = vst [vmem:[%s240 + $0x1f0] sm:$0xff] %v2898
        %3027 = vst [vmem:[%s240 + $0x1f8] sm:$0xff] %v2899
        %3028 = vst [vmem:[%s240 + $0x200] sm:$0xff] %v2900
        %3029 = vst [vmem:[%s240 + $0x208] sm:$0xff] %v2901
        %3030 = vst [vmem:[%s240 + $0x210] sm:$0xff] %v2902
        %3031 = vst [vmem:[%s240 + $0x218] sm:$0xff] %v2903
        %3032 = vst [vmem:[%s240 + $0x220] sm:$0xff] %v2904
        %3033 = vst [vmem:[%s240 + $0x228] sm:$0xff] %v2905
        %3034 = vst [vmem:[%s240 + $0x230] sm:$0xff] %v2906
        %3035 = vst [vmem:[%s240 + $0x238] sm:$0xff] %v2907
        %3036 = vst [vmem:[%s240 + $0x240] sm:$0xff] %v2908
        %3037 = vst [vmem:[%s240 + $0x248] sm:$0xff] %v2909
        %3038 = vst [vmem:[%s240 + $0x250] sm:$0xff] %v2910
        %3039 = vst [vmem:[%s240 + $0x258] sm:$0xff] %v2911
        %3040 = vst [vmem:[%s240 + $0x260] sm:$0xff] %v2912
        %3041 = vst [vmem:[%s240 + $0x268] sm:$0xff] %v2913
        %3042 = vst [vmem:[%s240 + $0x270] sm:$0xff] %v2914
        %3043 = vst [vmem:[%s240 + $0x278] sm:$0xff] %v2915
        %3044 = vst [vmem:[%s240 + $0x280] sm:$0xff] %v2916
        %3045 = vst [vmem:[%s240 + $0x288] sm:$0xff] %v2917
        %3046 = vst [vmem:[%s240 + $0x290] sm:$0xff] %v2918
        %3047 = vst [vmem:[%s240 + $0x298] sm:$0xff] %v2919
        %3048 = vst [vmem:[%s240 + $0x2a0] sm:$0xff] %v2920
        %3049 = vst [vmem:[%s240 + $0x2a8] sm:$0xff] %v2921
        %3050 = vst [vmem:[%s240 + $0x2b0] sm:$0xff] %v2922
        %3051 = vst [vmem:[%s240 + $0x2b8] sm:$0xff] %v2923
        %3052 = vst [vmem:[%s240 + $0x2c0] sm:$0xff] %v2924
        %3053 = vst [vmem:[%s240 + $0x2c8] sm:$0xff] %v2925
        %3054 = vst [vmem:[%s240 + $0x2d0] sm:$0xff] %v2926
        %3055 = vst [vmem:[%s240 + $0x2d8] sm:$0xff] %v2927
        %3056 = vst [vmem:[%s240 + $0x2e0] sm:$0xff] %v2928
        %3057 = vst [vmem:[%s240 + $0x2e8] sm:$0xff] %v2929
        %3058 = vst [vmem:[%s240 + $0x2f0] sm:$0xff] %v2930
        %3059 = vst [vmem:[%s240 + $0x2f8] sm:$0xff] %v2931
        %3060 = vst [vmem:[%s240 + $0x300] sm:$0xff] %v2932
        %3061 = vst [vmem:[%s240 + $0x308] sm:$0xff] %v2933
        %3062 = vst [vmem:[%s240 + $0x310] sm:$0xff] %v2934
        %3063 = vst [vmem:[%s240 + $0x318] sm:$0xff] %v2935
        %3064 = vst [vmem:[%s240 + $0x320] sm:$0xff] %v2936
        %3065 = vst [vmem:[%s240 + $0x328] sm:$0xff] %v2937
        %3066 = vst [vmem:[%s240 + $0x330] sm:$0xff] %v2938
        %3067 = vst [vmem:[%s240 + $0x338] sm:$0xff] %v2939
        %3068 = vst [vmem:[%s240 + $0x340] sm:$0xff] %v2940
        %3069 = vst [vmem:[%s240 + $0x348] sm:$0xff] %v2941
        %3070 = vst [vmem:[%s240 + $0x350] sm:$0xff] %v2942
        %3071 = vst [vmem:[%s240 + $0x358] sm:$0xff] %v2943
        %3072 = vst [vmem:[%s240 + $0x360] sm:$0xff] %v2944
        %3073 = vst [vmem:[%s240 + $0x368] sm:$0xff] %v2945
        %3074 = vst [vmem:[%s240 + $0x370] sm:$0xff] %v2946
        %3075 = vst [vmem:[%s240 + $0x378] sm:$0xff] %v2947
        %3076 = vst [vmem:[%s240 + $0x380] sm:$0xff] %v2948
        %3077 = vst [vmem:[%s240 + $0x388] sm:$0xff] %v2949
        %3078 = vst [vmem:[%s240 + $0x390] sm:$0xff] %v2950
        %3079 = vst [vmem:[%s240 + $0x398] sm:$0xff] %v2951
        %3080 = vst [vmem:[%s240 + $0x3a0] sm:$0xff] %v2952
        %3081 = vst [vmem:[%s240 + $0x3a8] sm:$0xff] %v2953
        %3082 = vst [vmem:[%s240 + $0x3b0] sm:$0xff] %v2954
        %3083 = vst [vmem:[%s240 + $0x3b8] sm:$0xff] %v2955
        %3084 = vst [vmem:[%s240 + $0x3c0] sm:$0xff] %v2956
        %3085 = vst [vmem:[%s240 + $0x3c8] sm:$0xff] %v2957
        %3086 = vst [vmem:[%s240 + $0x3d0] sm:$0xff] %v2958
        %3087 = vst [vmem:[%s240 + $0x3d8] sm:$0xff] %v2959
        %3088 = vst [vmem:[%s240 + $0x3e0] sm:$0xff] %v2960
        %3089 = vst [vmem:[%s240 + $0x3e8] sm:$0xff] %v2961
        %3090 = vst [vmem:[%s240 + $0x3f0] sm:$0xff] %v2962
        %3091 = vst [vmem:[%s240 + $0x3f8] sm:$0xff] %v2963
        %s3092 = sand.u32 %s121, 1
        %s3093 = scalar_lea.sflag [#allocation4], %s3092
        %s3094 = sand.u32 %s121, 1
        %s3095 = smul.addr %s3094, 1024
        %s3096 = scalar_lea.vmem [#allocation7], %s3095
        // Predicated region
        $region41: #{tpu_custom_call.1} parent=31 // pred_check
          %p3097 = pneg %p131
        $region42: #{tpu_custom_call.1} parent=31 // pred_check_branch
          %3099 = sbr.rel (%p3097) target = $region44
        $region43: #{tpu_custom_call.1} parent=31 // pred_region
          %s3100 = smul.u32 32, %s25
          %s3101 = smul.u32 4, %s26
          %s3103 = ssub.s32 16384, 16384
          %3104 = vsyncadd %s3093, %s3103
          %s3105 = smul.addr %s3100, 4
          %s3106 = sadd.s32 %s3101, %s3105
          %s3107 = smul.addr %s3106, 128
          %s3108 = scalar_lea.hbm %s3, %s3107
          %s3109 = sshll.u32 %s3096, 4
          %s3110 = int_to_ptr.vmem [resolvable:$true] %s3109
          %3115 = dma.vmem_to_hbm [thread:$0]  %s3110, 16384, %s3108, %s3093, 512, 512, 32
        $region44: #{tpu_custom_call.1} parent=31 // pred_fallthru
          _
      $region32: #{tpu_custom_call.1} parent=5 // pred_fallthru
        _
      %p3116 = scmp.le.s32.totalorder 2, %s16
      // Predicated region
      $region45: #{tpu_custom_call.1} parent=5 // pred_check
        %p3117 = pneg %p3116
      $region46: #{tpu_custom_call.1} parent=5 // pred_check_branch
        %3119 = sbr.rel (%p3117) target = $region48
      $region47: #{tpu_custom_call.1} parent=5 // pred_region
        %s3120 = ssub.s32 %s16, 2
        // Predicated region
        $region49: #{tpu_custom_call.1} parent=47 // pred_check
          %p3121 = pneg %p137
        $region50: #{tpu_custom_call.1} parent=47 // pred_check_branch
          %3123 = sbr.rel (%p3121) target = $region52
        $region51: #{tpu_custom_call.1} parent=47 // pred_region
          %s3124 = sand.u32 %s122, 1
          %s3125 = scalar_lea.sflag [#allocation4], %s3124
          %s3126 = sand.u32 %s122, 1
          %s3127 = smul.addr %s3126, 1024
          %s3128 = scalar_lea.vmem [#allocation7], %s3127
          %3129 = dma.done %s3125, 16384
        $region52: #{tpu_custom_call.1} parent=47 // pred_fallthru
          _
      $region48: #{tpu_custom_call.1} parent=5 // pred_fallthru
        _
    $region6: #{tpu_custom_call.1} parent=1 // loop_footer
      %s20 = sadd.s32 1, %s16
    $region7: #{tpu_custom_call.1} parent=1 // loop_footer_branch
      %15 = sbr.rel target = $region3
    $region8: #{tpu_custom_call.1} parent=1 // loop_exit
      _
    %3130 = vsyncpa [#allocation3], 1
    %s3131 = scalar_lea.sflag [#allocation3], 1
    %3132 = vsyncpa %s3131, 1
    %3133 = vsyncpa [#allocation6], 1
    %3134 = vsyncpa [#allocation4], 1
    %s3135 = scalar_lea.sflag [#allocation4], 1
    %3136 = vsyncpa %s3135, 1

</llo_original>
